<compile_context>
chip_gen: v7x
topology: tpu7x:2x2x1
jax: 0.10.0
libtpu: 0.0.40
codegen_flags: <defaults>
</compile_context>

<pallas_src>
import functools

import jax
import jax.numpy as jnp
from jax.experimental import pallas as pl
from jax.experimental.pallas import tpu as pltpu

EPS = 1e-5
# MXU operand dtype (accumulation is always f32).  Set to jnp.float32 for exact math.
MXU_DTYPE = jnp.bfloat16


# ---------------------------------------------------------------------------
# Fused BasicBlock kernel
# ---------------------------------------------------------------------------
def _basic_block_kernel(*refs, K, stride, Ho, Wo, has_down):
    """conv3x3(stride)+BN1+ReLU -> conv3x3+BN2 -> (+ downsample | identity) -> ReLU.

    refs (inputs..., outputs..., scratch...):
      xph_ref : (stride*stride, Hph, Wph, Cin) f32  phase-split zero-padded image
      w1_ref  : (K*K, Cin,  Cmid) MXU_DTYPE         (BN1 scale folded in)
      s1_ref  : (1, Cmid) f32                       (BN1 shift)
      w2_ref  : (K*K, Cmid, Cout) MXU_DTYPE         (BN2 scale folded in)
      s2_ref  : (1, Cout) f32
      [wd_ref : (Cin, Cout) MXU_DTYPE, sd_ref : (1, Cout) f32]   only if has_down
      o_ref   : (1, Ho*Wo, Cout) f32
      p_ref   : VMEM scratch (Ho+2, Wo+2, Cmid) f32  zero-padded conv1 output
    """
    if has_down:
        xph_ref, w1_ref, s1_ref, w2_ref, s2_ref, wd_ref, sd_ref, o_ref, p_ref = refs
    else:
        xph_ref, w1_ref, s1_ref, w2_ref, s2_ref, o_ref, p_ref = refs
        wd_ref = sd_ref = None

    Cin = xph_ref.shape[-1]
    Cmid = w1_ref.shape[-1]
    Cout = w2_ref.shape[-1]
    M = Ho * Wo

    # Phase planes of the zero-padded input: loaded once, reused by all 9 taps.
    planes = [xph_ref[i] for i in range(stride * stride)]

    # ---- conv1 (3x3, stride) + BN1 + ReLU : K*K shifted matmuls (in-kernel im2col)
    acc1 = jnp.zeros((M, Cmid), jnp.float32)
    ctr = None
    for kh in range(K):
        ph, a = kh % stride, kh // stride
        for kw in range(K):
            pw, b = kw % stride, kw // stride
            tap = planes[ph * stride + pw][a:a + Ho, b:b + Wo, :].reshape(M, Cin)
            if kh == K // 2 and kw == K // 2:
                ctr = tap  # centre tap == x[stride*ho, stride*wo, :] (residual source)
            acc1 = acc1 + jnp.dot(tap.astype(MXU_DTYPE), w1_ref[kh * K + kw],
                                  preferred_element_type=jnp.float32)
    out1 = jnp.maximum(acc1 + s1_ref[:, :], 0.0)

    # ---- zero-pad relu(out1) in VMEM scratch for conv2 (3x3, stride 1, pad 1)
    p_ref[:, :, :] = jnp.zeros_like(p_ref)
    p_ref[1:Ho + 1, 1:Wo + 1, :] = out1.reshape(Ho, Wo, Cmid)
    padded = p_ref[:, :, :]

    # ---- conv2 (3x3, stride 1) + BN2
    acc2 = jnp.zeros((M, Cout), jnp.float32)
    for kh in range(K):
        for kw in range(K):
            tap2 = padded[kh:kh + Ho, kw:kw + Wo, :].reshape(M, Cmid)
            acc2 = acc2 + jnp.dot(tap2.astype(MXU_DTYPE), w2_ref[kh * K + kw],
                                  preferred_element_type=jnp.float32)
    out2 = acc2 + s2_ref[:, :]

    # ---- shortcut (1x1 conv stride s + BN, or identity) fused into the epilogue
    if has_down:
        ident = jnp.dot(ctr.astype(MXU_DTYPE), wd_ref[:, :],
                        preferred_element_type=jnp.float32) + sd_ref[:, :]
    else:
        ident = ctr  # stride == 1 and Cin == Cout (checked in the wrapper), exact f32

    o_ref[0, :, :] = jnp.maximum(out2 + ident, 0.0)


# ---------------------------------------------------------------------------
# Wrapper (glue: BN folding, phase split, BlockSpecs)
# ---------------------------------------------------------------------------
def _fold_bn(w_hwio, bn):
    gamma, beta, mean, var = bn
    scale = gamma / jnp.sqrt(var + EPS)          # per-output-channel
    return w_hwio * scale, beta - mean * scale   # (scaled weights, shift)


@functools.partial(jax.jit, static_argnames=("stride",))
def basic_block_forward(x_nchw, params, *, stride=1):
    """BasicBlock.forward. x_nchw: (N, Cin, H, W) f32 -> (N, Cout, Ho, Wo) f32."""
    x = jnp.transpose(x_nchw, (0, 2, 3, 1)).astype(jnp.float32)   # NCHW -> NHWC
    N, H, W, Cin = x.shape
    K, pad = 3, 1
    Cmid = params["conv1_w"].shape[-1]
    Cout = params["conv2_w"].shape[-1]
    Ho = (H + 2 * pad - K) // stride + 1
    Wo = (W + 2 * pad - K) // stride + 1
    M = Ho * Wo
    has_down = "down_w" in params
    if not has_down:
        assert stride == 1 and Cin == Cout, "identity shortcut needs stride=1, Cin==Cout"

    # Fold inference-mode BatchNorm into the weights (host-side constant fold).
    w1, s1 = _fold_bn(params["conv1_w"], params["bn1"])
    w2, s2 = _fold_bn(params["conv2_w"], params["bn2"])
    w1 = w1.reshape(K * K, Cin, Cmid).astype(MXU_DTYPE)
    w2 = w2.reshape(K * K, Cmid, Cout).astype(MXU_DTYPE)
    s1 = s1.reshape(1, Cmid).astype(jnp.float32)
    s2 = s2.reshape(1, Cout).astype(jnp.float32)

    # Phase-split (space-to-depth) the zero-padded input so every conv tap inside the
    # kernel is a unit-stride static VMEM slice.
    xp = jnp.pad(x, ((0, 0), (pad, pad), (pad, pad), (0, 0)))
    Hp, Wp = H + 2 * pad, W + 2 * pad
    Hph, Wph = -(-Hp // stride), -(-Wp // stride)
    xp = jnp.pad(xp, ((0, 0), (0, Hph * stride - Hp), (0, Wph * stride - Wp), (0, 0)))
    xph = xp.reshape(N, Hph, stride, Wph, stride, Cin).transpose(0, 2, 4, 1, 3, 5)
    xph = xph.reshape(N * stride * stride, Hph, Wph, Cin)
    a_max = (K - 1) // stride
    assert a_max + Ho <= Hph and a_max + Wo <= Wph

    ss = stride * stride
    in_specs = [
        pl.BlockSpec((ss, Hph, Wph, Cin), lambda n: (n, 0, 0, 0)),
        pl.BlockSpec((K * K, Cin, Cmid), lambda n: (0, 0, 0)),
        pl.BlockSpec((1, Cmid), lambda n: (0, 0)),
        pl.BlockSpec((K * K, Cmid, Cout), lambda n: (0, 0, 0)),
        pl.BlockSpec((1, Cout), lambda n: (0, 0)),
    ]
    args = [xph, w1, s1, w2, s2]
    if has_down:
        wd, sd = _fold_bn(params["down_w"], params["down_bn"])
        args += [wd.reshape(Cin, Cout).astype(MXU_DTYPE),
                 sd.reshape(1, Cout).astype(jnp.float32)]
        in_specs += [pl.BlockSpec((Cin, Cout), lambda n: (0, 0)),
                     pl.BlockSpec((1, Cout), lambda n: (0, 0))]

    kern = functools.partial(_basic_block_kernel, K=K, stride=stride,
                             Ho=Ho, Wo=Wo, has_down=has_down)
    y = pl.pallas_call(
        kern,
        grid=(N,),
        in_specs=in_specs,
        out_specs=pl.BlockSpec((1, M, Cout), lambda n: (n, 0, 0)),
        out_shape=jax.ShapeDtypeStruct((N, M, Cout), jnp.float32),
        scratch_shapes=[pltpu.VMEM((Ho + 2, Wo + 2, Cmid), jnp.float32)],
        compiler_params=pltpu.CompilerParams(
            dimension_semantics=("parallel",)),  # batch -> 2nd TC on v7x; no-op v5e/v6e
    )(*args)
    y = y.reshape(N, Ho, Wo, Cout)
    return jnp.transpose(y, (0, 3, 1, 2))        # NHWC -> NCHW (PyTorch layout)


# ---------------------------------------------------------------------------
# Plain-JAX reference (for an in-script sanity check) and parameter init
# ---------------------------------------------------------------------------
def _ref_conv_bn(x_nchw, w_hwio, bn, stride, pad):
    gamma, beta, mean, var = bn
    w_oihw = jnp.transpose(w_hwio, (3, 2, 0, 1))
    y = jax.lax.conv_general_dilated(
        x_nchw, w_oihw, window_strides=(stride, stride),
        padding=((pad, pad), (pad, pad)),
        dimension_numbers=("NCHW", "OIHW", "NCHW"),
        precision=jax.lax.Precision.HIGHEST)
    scale = (gamma / jnp.sqrt(var + EPS)).reshape(1, -1, 1, 1)
    shift = (beta - mean * gamma / jnp.sqrt(var + EPS)).reshape(1, -1, 1, 1)
    return y * scale + shift


def basic_block_reference(x_nchw, params, *, stride=1):
    out = jax.nn.relu(_ref_conv_bn(x_nchw, params["conv1_w"], params["bn1"], stride, 1))
    out = _ref_conv_bn(out, params["conv2_w"], params["bn2"], 1, 1)
    if "down_w" in params:
        identity = _ref_conv_bn(x_nchw, params["down_w"], params["down_bn"], stride, 0)
    else:
        identity = x_nchw
    return jax.nn.relu(out + identity)


def init_block_params(key, inplanes, planes, stride):
    k1, k2, k3 = jax.random.split(key, 3)

    def conv_w(k, kh, kw, cin, cout):
        std = (2.0 / (cout * kh * kw)) ** 0.5      # kaiming_normal_(fan_out, relu)
        return std * jax.random.normal(k, (kh, kw, cin, cout), jnp.float32)

    def bn(c):                                     # (gamma, beta, running_mean, running_var)
        return (jnp.ones((c,), jnp.float32), jnp.zeros((c,), jnp.float32),
                jnp.zeros((c,), jnp.float32), jnp.ones((c,), jnp.float32))

    p = {"conv1_w": conv_w(k1, 3, 3, inplanes, planes), "bn1": bn(planes),
         "conv2_w": conv_w(k2, 3, 3, planes, planes), "bn2": bn(planes)}
    if stride != 1 or inplanes != planes:          # downsample = 1x1 conv (stride) + BN
        p["down_w"] = conv_w(k3, 1, 1, inplanes, planes)
        p["down_bn"] = bn(planes)
    return p


if __name__ == "__main__":
    key = jax.random.PRNGKey(0)
    kx, kb1, kb2 = jax.random.split(key, 3)
    x = jax.random.normal(kx, (2, 4, 16, 16), jnp.float32)   # NCHW, like PyTorch

    # Block with a downsample shortcut (stride 2, 4 -> 8 channels) followed by an
    # identity-shortcut block (stride 1, 8 -> 8): exercises both code paths.
    p1 = init_block_params(kb1, inplanes=4, planes=8, stride=2)
    p2 = init_block_params(kb2, inplanes=8, planes=8, stride=1)

    y = basic_block_forward(x, p1, stride=2)
    y = basic_block_forward(y, p2, stride=1)
    y = jax.block_until_ready(y)
    assert y.shape == (2, 8, 8, 8) and y.dtype == jnp.float32

    # Sanity check against a plain-JAX reference (loose tolerance: bf16 MXU operands).
    y_ref = basic_block_reference(basic_block_reference(x, p1, stride=2), p2, stride=1)
    err = float(jnp.max(jnp.abs(y - y_ref)))
    assert err < 0.25, f"mismatch vs reference: max abs err {err}"
    print("KERNEL_OK")
</pallas_src>

<mosaic_0001>
module attributes {stable_mosaic.version = 11 : i64} {
  func.func @_basic_block_kernel(%arg0: i32, %arg1: memref<4x9x9x4xf32, #tpu.memory_space<vmem>>, %arg2: memref<9x4x8xbf16, #tpu.memory_space<vmem>>, %arg3: memref<1x8xf32, #tpu.memory_space<vmem>>, %arg4: memref<9x8x8xbf16, #tpu.memory_space<vmem>>, %arg5: memref<1x8xf32, #tpu.memory_space<vmem>>, %arg6: memref<4x8xbf16, #tpu.memory_space<vmem>>, %arg7: memref<1x8xf32, #tpu.memory_space<vmem>>, %arg8: memref<1x64x8xf32, #tpu.memory_space<vmem>>, %arg9: memref<10x10x8xf32, #tpu.memory_space<vmem>>) attributes {dimension_semantics = [#tpu.dimension_semantics<parallel>], iteration_bounds = array<i64: 2>, scalar_prefetch = 0 : i64, scratch_operands = 1 : i64, tpu.core_type = #tpu.core_type<tc>, window_params = [{transform_indices = @transform_0, window_bounds = array<i64: 4, 9, 9, 4>}, {pipeline_mode = #tpu.pipeline_mode<synchronous>, transform_indices = @transform_1, window_bounds = array<i64: 9, 4, 8>}, {pipeline_mode = #tpu.pipeline_mode<synchronous>, transform_indices = @transform_2, window_bounds = array<i64: 1, 8>}, {pipeline_mode = #tpu.pipeline_mode<synchronous>, transform_indices = @transform_3, window_bounds = array<i64: 9, 8, 8>}, {pipeline_mode = #tpu.pipeline_mode<synchronous>, transform_indices = @transform_4, window_bounds = array<i64: 1, 8>}, {pipeline_mode = #tpu.pipeline_mode<synchronous>, transform_indices = @transform_5, window_bounds = array<i64: 4, 8>}, {pipeline_mode = #tpu.pipeline_mode<synchronous>, transform_indices = @transform_6, window_bounds = array<i64: 1, 8>}, {transform_indices = @transform_7, window_bounds = array<i64: 1, 64, 8>}]} {
    %c0 = arith.constant 0 : index
    %c0_0 = arith.constant 0 : index
    %c0_1 = arith.constant 0 : index
    %c0_2 = arith.constant 0 : index
    %0 = vector.load %arg1[%c0, %c0_0, %c0_1, %c0_2] : memref<4x9x9x4xf32, #tpu.memory_space<vmem>>, vector<1x9x9x4xf32>
    %1 = vector.shape_cast %0 : vector<1x9x9x4xf32> to vector<9x9x4xf32>
    %c1 = arith.constant 1 : index
    %c0_3 = arith.constant 0 : index
    %c0_4 = arith.constant 0 : index
    %c0_5 = arith.constant 0 : index
    %2 = vector.load %arg1[%c1, %c0_3, %c0_4, %c0_5] : memref<4x9x9x4xf32, #tpu.memory_space<vmem>>, vector<1x9x9x4xf32>
    %3 = vector.shape_cast %2 : vector<1x9x9x4xf32> to vector<9x9x4xf32>
    %c2 = arith.constant 2 : index
    %c0_6 = arith.constant 0 : index
    %c0_7 = arith.constant 0 : index
    %c0_8 = arith.constant 0 : index
    %4 = vector.load %arg1[%c2, %c0_6, %c0_7, %c0_8] : memref<4x9x9x4xf32, #tpu.memory_space<vmem>>, vector<1x9x9x4xf32>
    %5 = vector.shape_cast %4 : vector<1x9x9x4xf32> to vector<9x9x4xf32>
    %c3 = arith.constant 3 : index
    %c0_9 = arith.constant 0 : index
    %c0_10 = arith.constant 0 : index
    %c0_11 = arith.constant 0 : index
    %6 = vector.load %arg1[%c3, %c0_9, %c0_10, %c0_11] : memref<4x9x9x4xf32, #tpu.memory_space<vmem>>, vector<1x9x9x4xf32>
    %7 = vector.shape_cast %6 : vector<1x9x9x4xf32> to vector<9x9x4xf32>
    %cst = arith.constant 0.000000e+00 : f32
    %8 = vector.broadcast %cst : f32 to vector<64x8xf32>
    %9 = vector.extract_strided_slice %1 {offsets = [0, 0, 0], sizes = [8, 8, 4], strides = [1, 1, 1]} : vector<9x9x4xf32> to vector<8x8x4xf32>
    %10 = vector.shape_cast %9 : vector<8x8x4xf32> to vector<64x4xf32>
    %11 = arith.truncf %10 : vector<64x4xf32> to vector<64x4xbf16>
    %c0_12 = arith.constant 0 : index
    %c0_13 = arith.constant 0 : index
    %c0_14 = arith.constant 0 : index
    %12 = vector.load %arg2[%c0_12, %c0_13, %c0_14] : memref<9x4x8xbf16, #tpu.memory_space<vmem>>, vector<1x4x8xbf16>
    %13 = vector.shape_cast %12 : vector<1x4x8xbf16> to vector<4x8xbf16>
    %cst_15 = arith.constant dense<0.000000e+00> : vector<64x8xf32>
    %14 = tpu.matmul %11, %13, %cst_15 {dimension_numbers = #tpu.dot_dimension_numbers<[1], [0], [0], [1], [0, 0, 1, 1], [], []>} : vector<64x4xbf16>, vector<4x8xbf16>, vector<64x8xf32> -> vector<64x8xf32>
    %15 = arith.addf %8, %14 : vector<64x8xf32>
    %16 = vector.extract_strided_slice %3 {offsets = [0, 0, 0], sizes = [8, 8, 4], strides = [1, 1, 1]} : vector<9x9x4xf32> to vector<8x8x4xf32>
    %17 = vector.shape_cast %16 : vector<8x8x4xf32> to vector<64x4xf32>
    %18 = arith.truncf %17 : vector<64x4xf32> to vector<64x4xbf16>
    %c1_16 = arith.constant 1 : index
    %c0_17 = arith.constant 0 : index
    %c0_18 = arith.constant 0 : index
    %19 = vector.load %arg2[%c1_16, %c0_17, %c0_18] : memref<9x4x8xbf16, #tpu.memory_space<vmem>>, vector<1x4x8xbf16>
    %20 = vector.shape_cast %19 : vector<1x4x8xbf16> to vector<4x8xbf16>
    %cst_19 = arith.constant dense<0.000000e+00> : vector<64x8xf32>
    %21 = tpu.matmul %18, %20, %cst_19 {dimension_numbers = #tpu.dot_dimension_numbers<[1], [0], [0], [1], [0, 0, 1, 1], [], []>} : vector<64x4xbf16>, vector<4x8xbf16>, vector<64x8xf32> -> vector<64x8xf32>
    %22 = arith.addf %15, %21 : vector<64x8xf32>
    %23 = vector.extract_strided_slice %1 {offsets = [0, 1, 0], sizes = [8, 8, 4], strides = [1, 1, 1]} : vector<9x9x4xf32> to vector<8x8x4xf32>
    %24 = vector.shape_cast %23 : vector<8x8x4xf32> to vector<64x4xf32>
    %25 = arith.truncf %24 : vector<64x4xf32> to vector<64x4xbf16>
    %c2_20 = arith.constant 2 : index
    %c0_21 = arith.constant 0 : index
    %c0_22 = arith.constant 0 : index
    %26 = vector.load %arg2[%c2_20, %c0_21, %c0_22] : memref<9x4x8xbf16, #tpu.memory_space<vmem>>, vector<1x4x8xbf16>
    %27 = vector.shape_cast %26 : vector<1x4x8xbf16> to vector<4x8xbf16>
    %cst_23 = arith.constant dense<0.000000e+00> : vector<64x8xf32>
    %28 = tpu.matmul %25, %27, %cst_23 {dimension_numbers = #tpu.dot_dimension_numbers<[1], [0], [0], [1], [0, 0, 1, 1], [], []>} : vector<64x4xbf16>, vector<4x8xbf16>, vector<64x8xf32> -> vector<64x8xf32>
    %29 = arith.addf %22, %28 : vector<64x8xf32>
    %30 = vector.extract_strided_slice %5 {offsets = [0, 0, 0], sizes = [8, 8, 4], strides = [1, 1, 1]} : vector<9x9x4xf32> to vector<8x8x4xf32>
    %31 = vector.shape_cast %30 : vector<8x8x4xf32> to vector<64x4xf32>
    %32 = arith.truncf %31 : vector<64x4xf32> to vector<64x4xbf16>
    %c3_24 = arith.constant 3 : index
    %c0_25 = arith.constant 0 : index
    %c0_26 = arith.constant 0 : index
    %33 = vector.load %arg2[%c3_24, %c0_25, %c0_26] : memref<9x4x8xbf16, #tpu.memory_space<vmem>>, vector<1x4x8xbf16>
    %34 = vector.shape_cast %33 : vector<1x4x8xbf16> to vector<4x8xbf16>
    %cst_27 = arith.constant dense<0.000000e+00> : vector<64x8xf32>
    %35 = tpu.matmul %32, %34, %cst_27 {dimension_numbers = #tpu.dot_dimension_numbers<[1], [0], [0], [1], [0, 0, 1, 1], [], []>} : vector<64x4xbf16>, vector<4x8xbf16>, vector<64x8xf32> -> vector<64x8xf32>
    %36 = arith.addf %29, %35 : vector<64x8xf32>
    %37 = vector.extract_strided_slice %7 {offsets = [0, 0, 0], sizes = [8, 8, 4], strides = [1, 1, 1]} : vector<9x9x4xf32> to vector<8x8x4xf32>
    %38 = vector.shape_cast %37 : vector<8x8x4xf32> to vector<64x4xf32>
    %39 = arith.truncf %38 : vector<64x4xf32> to vector<64x4xbf16>
    %c4 = arith.constant 4 : index
    %c0_28 = arith.constant 0 : index
    %c0_29 = arith.constant 0 : index
    %40 = vector.load %arg2[%c4, %c0_28, %c0_29] : memref<9x4x8xbf16, #tpu.memory_space<vmem>>, vector<1x4x8xbf16>
    %41 = vector.shape_cast %40 : vector<1x4x8xbf16> to vector<4x8xbf16>
    %cst_30 = arith.constant dense<0.000000e+00> : vector<64x8xf32>
    %42 = tpu.matmul %39, %41, %cst_30 {dimension_numbers = #tpu.dot_dimension_numbers<[1], [0], [0], [1], [0, 0, 1, 1], [], []>} : vector<64x4xbf16>, vector<4x8xbf16>, vector<64x8xf32> -> vector<64x8xf32>
    %43 = arith.addf %36, %42 : vector<64x8xf32>
    %44 = vector.extract_strided_slice %5 {offsets = [0, 1, 0], sizes = [8, 8, 4], strides = [1, 1, 1]} : vector<9x9x4xf32> to vector<8x8x4xf32>
    %45 = vector.shape_cast %44 : vector<8x8x4xf32> to vector<64x4xf32>
    %46 = arith.truncf %45 : vector<64x4xf32> to vector<64x4xbf16>
    %c5 = arith.constant 5 : index
    %c0_31 = arith.constant 0 : index
    %c0_32 = arith.constant 0 : index
    %47 = vector.load %arg2[%c5, %c0_31, %c0_32] : memref<9x4x8xbf16, #tpu.memory_space<vmem>>, vector<1x4x8xbf16>
    %48 = vector.shape_cast %47 : vector<1x4x8xbf16> to vector<4x8xbf16>
    %cst_33 = arith.constant dense<0.000000e+00> : vector<64x8xf32>
    %49 = tpu.matmul %46, %48, %cst_33 {dimension_numbers = #tpu.dot_dimension_numbers<[1], [0], [0], [1], [0, 0, 1, 1], [], []>} : vector<64x4xbf16>, vector<4x8xbf16>, vector<64x8xf32> -> vector<64x8xf32>
    %50 = arith.addf %43, %49 : vector<64x8xf32>
    %51 = vector.extract_strided_slice %1 {offsets = [1, 0, 0], sizes = [8, 8, 4], strides = [1, 1, 1]} : vector<9x9x4xf32> to vector<8x8x4xf32>
    %52 = vector.shape_cast %51 : vector<8x8x4xf32> to vector<64x4xf32>
    %53 = arith.truncf %52 : vector<64x4xf32> to vector<64x4xbf16>
    %c6 = arith.constant 6 : index
    %c0_34 = arith.constant 0 : index
    %c0_35 = arith.constant 0 : index
    %54 = vector.load %arg2[%c6, %c0_34, %c0_35] : memref<9x4x8xbf16, #tpu.memory_space<vmem>>, vector<1x4x8xbf16>
    %55 = vector.shape_cast %54 : vector<1x4x8xbf16> to vector<4x8xbf16>
    %cst_36 = arith.constant dense<0.000000e+00> : vector<64x8xf32>
    %56 = tpu.matmul %53, %55, %cst_36 {dimension_numbers = #tpu.dot_dimension_numbers<[1], [0], [0], [1], [0, 0, 1, 1], [], []>} : vector<64x4xbf16>, vector<4x8xbf16>, vector<64x8xf32> -> vector<64x8xf32>
    %57 = arith.addf %50, %56 : vector<64x8xf32>
    %58 = vector.extract_strided_slice %3 {offsets = [1, 0, 0], sizes = [8, 8, 4], strides = [1, 1, 1]} : vector<9x9x4xf32> to vector<8x8x4xf32>
    %59 = vector.shape_cast %58 : vector<8x8x4xf32> to vector<64x4xf32>
    %60 = arith.truncf %59 : vector<64x4xf32> to vector<64x4xbf16>
    %c7 = arith.constant 7 : index
    %c0_37 = arith.constant 0 : index
    %c0_38 = arith.constant 0 : index
    %61 = vector.load %arg2[%c7, %c0_37, %c0_38] : memref<9x4x8xbf16, #tpu.memory_space<vmem>>, vector<1x4x8xbf16>
    %62 = vector.shape_cast %61 : vector<1x4x8xbf16> to vector<4x8xbf16>
    %cst_39 = arith.constant dense<0.000000e+00> : vector<64x8xf32>
    %63 = tpu.matmul %60, %62, %cst_39 {dimension_numbers = #tpu.dot_dimension_numbers<[1], [0], [0], [1], [0, 0, 1, 1], [], []>} : vector<64x4xbf16>, vector<4x8xbf16>, vector<64x8xf32> -> vector<64x8xf32>
    %64 = arith.addf %57, %63 : vector<64x8xf32>
    %65 = vector.extract_strided_slice %1 {offsets = [1, 1, 0], sizes = [8, 8, 4], strides = [1, 1, 1]} : vector<9x9x4xf32> to vector<8x8x4xf32>
    %66 = vector.shape_cast %65 : vector<8x8x4xf32> to vector<64x4xf32>
    %67 = arith.truncf %66 : vector<64x4xf32> to vector<64x4xbf16>
    %c8 = arith.constant 8 : index
    %c0_40 = arith.constant 0 : index
    %c0_41 = arith.constant 0 : index
    %68 = vector.load %arg2[%c8, %c0_40, %c0_41] : memref<9x4x8xbf16, #tpu.memory_space<vmem>>, vector<1x4x8xbf16>
    %69 = vector.shape_cast %68 : vector<1x4x8xbf16> to vector<4x8xbf16>
    %cst_42 = arith.constant dense<0.000000e+00> : vector<64x8xf32>
    %70 = tpu.matmul %67, %69, %cst_42 {dimension_numbers = #tpu.dot_dimension_numbers<[1], [0], [0], [1], [0, 0, 1, 1], [], []>} : vector<64x4xbf16>, vector<4x8xbf16>, vector<64x8xf32> -> vector<64x8xf32>
    %71 = arith.addf %64, %70 : vector<64x8xf32>
    %c0_43 = arith.constant 0 : index
    %c0_44 = arith.constant 0 : index
    %72 = vector.load %arg3[%c0_43, %c0_44] : memref<1x8xf32, #tpu.memory_space<vmem>>, vector<1x8xf32>
    %73 = vector.broadcast %72 : vector<1x8xf32> to vector<64x8xf32>
    %74 = arith.addf %71, %73 : vector<64x8xf32>
    %cst_45 = arith.constant 0.000000e+00 : f32
    %75 = vector.broadcast %cst_45 : f32 to vector<64x8xf32>
    %76 = arith.maximumf %74, %75 : vector<64x8xf32>
    %cst_46 = arith.constant 0.000000e+00 : f32
    %77 = vector.broadcast %cst_46 : f32 to vector<10x10x8xf32>
    %c0_47 = arith.constant 0 : index
    %c0_48 = arith.constant 0 : index
    %c0_49 = arith.constant 0 : index
    %78 = vector.load %arg9[%c0_47, %c0_48, %c0_49] : memref<10x10x8xf32, #tpu.memory_space<vmem>>, vector<10x10x8xf32>
    tpu.vector_store %arg9[%c0_47, %c0_48, %c0_49], %77 {strides = array<i32>} : memref<10x10x8xf32, #tpu.memory_space<vmem>>, vector<10x10x8xf32>,
    %79 = vector.shape_cast %76 : vector<64x8xf32> to vector<8x8x8xf32>
    %c1_50 = arith.constant 1 : index
    %c1_51 = arith.constant 1 : index
    %c0_52 = arith.constant 0 : index
    %80 = vector.load %arg9[%c1_50, %c1_51, %c0_52] : memref<10x10x8xf32, #tpu.memory_space<vmem>>, vector<8x8x8xf32>
    tpu.vector_store %arg9[%c1_50, %c1_51, %c0_52], %79 {strides = array<i32>} : memref<10x10x8xf32, #tpu.memory_space<vmem>>, vector<8x8x8xf32>,
    %c0_53 = arith.constant 0 : index
    %c0_54 = arith.constant 0 : index
    %c0_55 = arith.constant 0 : index
    %81 = vector.load %arg9[%c0_53, %c0_54, %c0_55] : memref<10x10x8xf32, #tpu.memory_space<vmem>>, vector<10x10x8xf32>
    %cst_56 = arith.constant 0.000000e+00 : f32
    %82 = vector.broadcast %cst_56 : f32 to vector<64x8xf32>
    %83 = vector.extract_strided_slice %81 {offsets = [0, 0, 0], sizes = [8, 8, 8], strides = [1, 1, 1]} : vector<10x10x8xf32> to vector<8x8x8xf32>
    %84 = vector.shape_cast %83 : vector<8x8x8xf32> to vector<64x8xf32>
    %85 = arith.truncf %84 : vector<64x8xf32> to vector<64x8xbf16>
    %c0_57 = arith.constant 0 : index
    %c0_58 = arith.constant 0 : index
    %c0_59 = arith.constant 0 : index
    %86 = vector.load %arg4[%c0_57, %c0_58, %c0_59] : memref<9x8x8xbf16, #tpu.memory_space<vmem>>, vector<1x8x8xbf16>
    %87 = vector.shape_cast %86 : vector<1x8x8xbf16> to vector<8x8xbf16>
    %cst_60 = arith.constant dense<0.000000e+00> : vector<64x8xf32>
    %88 = tpu.matmul %85, %87, %cst_60 {dimension_numbers = #tpu.dot_dimension_numbers<[1], [0], [0], [1], [0, 0, 1, 1], [], []>} : vector<64x8xbf16>, vector<8x8xbf16>, vector<64x8xf32> -> vector<64x8xf32>
    %89 = arith.addf %82, %88 : vector<64x8xf32>
    %90 = vector.extract_strided_slice %81 {offsets = [0, 1, 0], sizes = [8, 8, 8], strides = [1, 1, 1]} : vector<10x10x8xf32> to vector<8x8x8xf32>
    %91 = vector.shape_cast %90 : vector<8x8x8xf32> to vector<64x8xf32>
    %92 = arith.truncf %91 : vector<64x8xf32> to vector<64x8xbf16>
    %c1_61 = arith.constant 1 : index
    %c0_62 = arith.constant 0 : index
    %c0_63 = arith.constant 0 : index
    %93 = vector.load %arg4[%c1_61, %c0_62, %c0_63] : memref<9x8x8xbf16, #tpu.memory_space<vmem>>, vector<1x8x8xbf16>
    %94 = vector.shape_cast %93 : vector<1x8x8xbf16> to vector<8x8xbf16>
    %cst_64 = arith.constant dense<0.000000e+00> : vector<64x8xf32>
    %95 = tpu.matmul %92, %94, %cst_64 {dimension_numbers = #tpu.dot_dimension_numbers<[1], [0], [0], [1], [0, 0, 1, 1], [], []>} : vector<64x8xbf16>, vector<8x8xbf16>, vector<64x8xf32> -> vector<64x8xf32>
    %96 = arith.addf %89, %95 : vector<64x8xf32>
    %97 = vector.extract_strided_slice %81 {offsets = [0, 2, 0], sizes = [8, 8, 8], strides = [1, 1, 1]} : vector<10x10x8xf32> to vector<8x8x8xf32>
    %98 = vector.shape_cast %97 : vector<8x8x8xf32> to vector<64x8xf32>
    %99 = arith.truncf %98 : vector<64x8xf32> to vector<64x8xbf16>
    %c2_65 = arith.constant 2 : index
    %c0_66 = arith.constant 0 : index
    %c0_67 = arith.constant 0 : index
    %100 = vector.load %arg4[%c2_65, %c0_66, %c0_67] : memref<9x8x8xbf16, #tpu.memory_space<vmem>>, vector<1x8x8xbf16>
    %101 = vector.shape_cast %100 : vector<1x8x8xbf16> to vector<8x8xbf16>
    %cst_68 = arith.constant dense<0.000000e+00> : vector<64x8xf32>
    %102 = tpu.matmul %99, %101, %cst_68 {dimension_numbers = #tpu.dot_dimension_numbers<[1], [0], [0], [1], [0, 0, 1, 1], [], []>} : vector<64x8xbf16>, vector<8x8xbf16>, vector<64x8xf32> -> vector<64x8xf32>
    %103 = arith.addf %96, %102 : vector<64x8xf32>
    %104 = vector.extract_strided_slice %81 {offsets = [1, 0, 0], sizes = [8, 8, 8], strides = [1, 1, 1]} : vector<10x10x8xf32> to vector<8x8x8xf32>
    %105 = vector.shape_cast %104 : vector<8x8x8xf32> to vector<64x8xf32>
    %106 = arith.truncf %105 : vector<64x8xf32> to vector<64x8xbf16>
    %c3_69 = arith.constant 3 : index
    %c0_70 = arith.constant 0 : index
    %c0_71 = arith.constant 0 : index
    %107 = vector.load %arg4[%c3_69, %c0_70, %c0_71] : memref<9x8x8xbf16, #tpu.memory_space<vmem>>, vector<1x8x8xbf16>
    %108 = vector.shape_cast %107 : vector<1x8x8xbf16> to vector<8x8xbf16>
    %cst_72 = arith.constant dense<0.000000e+00> : vector<64x8xf32>
    %109 = tpu.matmul %106, %108, %cst_72 {dimension_numbers = #tpu.dot_dimension_numbers<[1], [0], [0], [1], [0, 0, 1, 1], [], []>} : vector<64x8xbf16>, vector<8x8xbf16>, vector<64x8xf32> -> vector<64x8xf32>
    %110 = arith.addf %103, %109 : vector<64x8xf32>
    %111 = vector.extract_strided_slice %81 {offsets = [1, 1, 0], sizes = [8, 8, 8], strides = [1, 1, 1]} : vector<10x10x8xf32> to vector<8x8x8xf32>
    %112 = vector.shape_cast %111 : vector<8x8x8xf32> to vector<64x8xf32>
    %113 = arith.truncf %112 : vector<64x8xf32> to vector<64x8xbf16>
    %c4_73 = arith.constant 4 : index
    %c0_74 = arith.constant 0 : index
    %c0_75 = arith.constant 0 : index
    %114 = vector.load %arg4[%c4_73, %c0_74, %c0_75] : memref<9x8x8xbf16, #tpu.memory_space<vmem>>, vector<1x8x8xbf16>
    %115 = vector.shape_cast %114 : vector<1x8x8xbf16> to vector<8x8xbf16>
    %cst_76 = arith.constant dense<0.000000e+00> : vector<64x8xf32>
    %116 = tpu.matmul %113, %115, %cst_76 {dimension_numbers = #tpu.dot_dimension_numbers<[1], [0], [0], [1], [0, 0, 1, 1], [], []>} : vector<64x8xbf16>, vector<8x8xbf16>, vector<64x8xf32> -> vector<64x8xf32>
    %117 = arith.addf %110, %116 : vector<64x8xf32>
    %118 = vector.extract_strided_slice %81 {offsets = [1, 2, 0], sizes = [8, 8, 8], strides = [1, 1, 1]} : vector<10x10x8xf32> to vector<8x8x8xf32>
    %119 = vector.shape_cast %118 : vector<8x8x8xf32> to vector<64x8xf32>
    %120 = arith.truncf %119 : vector<64x8xf32> to vector<64x8xbf16>
    %c5_77 = arith.constant 5 : index
    %c0_78 = arith.constant 0 : index
    %c0_79 = arith.constant 0 : index
    %121 = vector.load %arg4[%c5_77, %c0_78, %c0_79] : memref<9x8x8xbf16, #tpu.memory_space<vmem>>, vector<1x8x8xbf16>
    %122 = vector.shape_cast %121 : vector<1x8x8xbf16> to vector<8x8xbf16>
    %cst_80 = arith.constant dense<0.000000e+00> : vector<64x8xf32>
    %123 = tpu.matmul %120, %122, %cst_80 {dimension_numbers = #tpu.dot_dimension_numbers<[1], [0], [0], [1], [0, 0, 1, 1], [], []>} : vector<64x8xbf16>, vector<8x8xbf16>, vector<64x8xf32> -> vector<64x8xf32>
    %124 = arith.addf %117, %123 : vector<64x8xf32>
    %125 = vector.extract_strided_slice %81 {offsets = [2, 0, 0], sizes = [8, 8, 8], strides = [1, 1, 1]} : vector<10x10x8xf32> to vector<8x8x8xf32>
    %126 = vector.shape_cast %125 : vector<8x8x8xf32> to vector<64x8xf32>
    %127 = arith.truncf %126 : vector<64x8xf32> to vector<64x8xbf16>
    %c6_81 = arith.constant 6 : index
    %c0_82 = arith.constant 0 : index
    %c0_83 = arith.constant 0 : index
    %128 = vector.load %arg4[%c6_81, %c0_82, %c0_83] : memref<9x8x8xbf16, #tpu.memory_space<vmem>>, vector<1x8x8xbf16>
    %129 = vector.shape_cast %128 : vector<1x8x8xbf16> to vector<8x8xbf16>
    %cst_84 = arith.constant dense<0.000000e+00> : vector<64x8xf32>
    %130 = tpu.matmul %127, %129, %cst_84 {dimension_numbers = #tpu.dot_dimension_numbers<[1], [0], [0], [1], [0, 0, 1, 1], [], []>} : vector<64x8xbf16>, vector<8x8xbf16>, vector<64x8xf32> -> vector<64x8xf32>
    %131 = arith.addf %124, %130 : vector<64x8xf32>
    %132 = vector.extract_strided_slice %81 {offsets = [2, 1, 0], sizes = [8, 8, 8], strides = [1, 1, 1]} : vector<10x10x8xf32> to vector<8x8x8xf32>
    %133 = vector.shape_cast %132 : vector<8x8x8xf32> to vector<64x8xf32>
    %134 = arith.truncf %133 : vector<64x8xf32> to vector<64x8xbf16>
    %c7_85 = arith.constant 7 : index
    %c0_86 = arith.constant 0 : index
    %c0_87 = arith.constant 0 : index
    %135 = vector.load %arg4[%c7_85, %c0_86, %c0_87] : memref<9x8x8xbf16, #tpu.memory_space<vmem>>, vector<1x8x8xbf16>
    %136 = vector.shape_cast %135 : vector<1x8x8xbf16> to vector<8x8xbf16>
    %cst_88 = arith.constant dense<0.000000e+00> : vector<64x8xf32>
    %137 = tpu.matmul %134, %136, %cst_88 {dimension_numbers = #tpu.dot_dimension_numbers<[1], [0], [0], [1], [0, 0, 1, 1], [], []>} : vector<64x8xbf16>, vector<8x8xbf16>, vector<64x8xf32> -> vector<64x8xf32>
    %138 = arith.addf %131, %137 : vector<64x8xf32>
    %139 = vector.extract_strided_slice %81 {offsets = [2, 2, 0], sizes = [8, 8, 8], strides = [1, 1, 1]} : vector<10x10x8xf32> to vector<8x8x8xf32>
    %140 = vector.shape_cast %139 : vector<8x8x8xf32> to vector<64x8xf32>
    %141 = arith.truncf %140 : vector<64x8xf32> to vector<64x8xbf16>
    %c8_89 = arith.constant 8 : index
    %c0_90 = arith.constant 0 : index
    %c0_91 = arith.constant 0 : index
    %142 = vector.load %arg4[%c8_89, %c0_90, %c0_91] : memref<9x8x8xbf16, #tpu.memory_space<vmem>>, vector<1x8x8xbf16>
    %143 = vector.shape_cast %142 : vector<1x8x8xbf16> to vector<8x8xbf16>
    %cst_92 = arith.constant dense<0.000000e+00> : vector<64x8xf32>
    %144 = tpu.matmul %141, %143, %cst_92 {dimension_numbers = #tpu.dot_dimension_numbers<[1], [0], [0], [1], [0, 0, 1, 1], [], []>} : vector<64x8xbf16>, vector<8x8xbf16>, vector<64x8xf32> -> vector<64x8xf32>
    %145 = arith.addf %138, %144 : vector<64x8xf32>
    %c0_93 = arith.constant 0 : index
    %c0_94 = arith.constant 0 : index
    %146 = vector.load %arg5[%c0_93, %c0_94] : memref<1x8xf32, #tpu.memory_space<vmem>>, vector<1x8xf32>
    %147 = vector.broadcast %146 : vector<1x8xf32> to vector<64x8xf32>
    %148 = arith.addf %145, %147 : vector<64x8xf32>
    %149 = arith.truncf %38 : vector<64x4xf32> to vector<64x4xbf16>
    %c0_95 = arith.constant 0 : index
    %c0_96 = arith.constant 0 : index
    %150 = vector.load %arg6[%c0_95, %c0_96] : memref<4x8xbf16, #tpu.memory_space<vmem>>, vector<4x8xbf16>
    %cst_97 = arith.constant dense<0.000000e+00> : vector<64x8xf32>
    %151 = tpu.matmul %149, %150, %cst_97 {dimension_numbers = #tpu.dot_dimension_numbers<[1], [0], [0], [1], [0, 0, 1, 1], [], []>} : vector<64x4xbf16>, vector<4x8xbf16>, vector<64x8xf32> -> vector<64x8xf32>
    %c0_98 = arith.constant 0 : index
    %c0_99 = arith.constant 0 : index
    %152 = vector.load %arg7[%c0_98, %c0_99] : memref<1x8xf32, #tpu.memory_space<vmem>>, vector<1x8xf32>
    %153 = vector.broadcast %152 : vector<1x8xf32> to vector<64x8xf32>
    %154 = arith.addf %151, %153 : vector<64x8xf32>
    %155 = arith.addf %148, %154 : vector<64x8xf32>
    %cst_100 = arith.constant 0.000000e+00 : f32
    %156 = vector.broadcast %cst_100 : f32 to vector<64x8xf32>
    %157 = arith.maximumf %155, %156 : vector<64x8xf32>
    %c0_101 = arith.constant 0 : index
    %c0_102 = arith.constant 0 : index
    %c0_103 = arith.constant 0 : index
    %158 = vector.load %arg8[%c0_101, %c0_102, %c0_103] : memref<1x64x8xf32, #tpu.memory_space<vmem>>, vector<1x64x8xf32>
    %159 = vector.shape_cast %158 : vector<1x64x8xf32> to vector<64x8xf32>
    %160 = vector.shape_cast %157 : vector<64x8xf32> to vector<1x64x8xf32>
    tpu.vector_store %arg8[%c0_101, %c0_102, %c0_103], %160 {strides = array<i32>} : memref<1x64x8xf32, #tpu.memory_space<vmem>>, vector<1x64x8xf32>,
    return
  }
  func.func @transform_0(%arg0: i32) -> (i32, i32, i32, i32) {
    %c0_i32 = arith.constant 0 : i32
    %c0_i32_0 = arith.constant 0 : i32
    %c0_i32_1 = arith.constant 0 : i32
    %c0_i32_2 = arith.constant 0 : i32
    return %arg0, %c0_i32, %c0_i32_0, %c0_i32_1 : i32, i32, i32, i32
  }
  func.func @transform_1(%arg0: i32) -> (i32, i32, i32) {
    %c0_i32 = arith.constant 0 : i32
    %c0_i32_0 = arith.constant 0 : i32
    %c0_i32_1 = arith.constant 0 : i32
    %c0_i32_2 = arith.constant 0 : i32
    return %c0_i32, %c0_i32_0, %c0_i32_1 : i32, i32, i32
  }
  func.func @transform_2(%arg0: i32) -> (i32, i32) {
    %c0_i32 = arith.constant 0 : i32
    %c0_i32_0 = arith.constant 0 : i32
    %c0_i32_1 = arith.constant 0 : i32
    return %c0_i32, %c0_i32_0 : i32, i32
  }
  func.func @transform_3(%arg0: i32) -> (i32, i32, i32) {
    %c0_i32 = arith.constant 0 : i32
    %c0_i32_0 = arith.constant 0 : i32
    %c0_i32_1 = arith.constant 0 : i32
    %c0_i32_2 = arith.constant 0 : i32
    return %c0_i32, %c0_i32_0, %c0_i32_1 : i32, i32, i32
  }
  func.func @transform_4(%arg0: i32) -> (i32, i32) {
    %c0_i32 = arith.constant 0 : i32
    %c0_i32_0 = arith.constant 0 : i32
    %c0_i32_1 = arith.constant 0 : i32
    return %c0_i32, %c0_i32_0 : i32, i32
  }
  func.func @transform_5(%arg0: i32) -> (i32, i32) {
    %c0_i32 = arith.constant 0 : i32
    %c0_i32_0 = arith.constant 0 : i32
    %c0_i32_1 = arith.constant 0 : i32
    return %c0_i32, %c0_i32_0 : i32, i32
  }
  func.func @transform_6(%arg0: i32) -> (i32, i32) {
    %c0_i32 = arith.constant 0 : i32
    %c0_i32_0 = arith.constant 0 : i32
    %c0_i32_1 = arith.constant 0 : i32
    return %c0_i32, %c0_i32_0 : i32, i32
  }
  func.func @transform_7(%arg0: i32) -> (i32, i32, i32) {
    %c0_i32 = arith.constant 0 : i32
    %c0_i32_0 = arith.constant 0 : i32
    %c0_i32_1 = arith.constant 0 : i32
    return %arg0, %c0_i32, %c0_i32_0 : i32, i32, i32
  }
}

</mosaic_0001>

<llo_original>
// kernel: basic_block_forward.1
$region0: #{basic_block_forward.1}
  #allocation0 [shape = 'u32[]', space=smem, size = 0x4, offset = 0x4, fixed_abs, tag = 'smem constant byte address 0x4 - core index']
  #allocation1 [shape = 'u32[144,128]{1,0:T(1,128)}', space=vmem, size = 0x12000, scoped, tag = 'internal scratch']
  #allocation2 [shape = 'f32[10,10,8]{2,1,0:T(8,128)}', space=vmem, size = 0x14000, scoped, tag = 'scratch operand']
  %s0 = inlined_call_operand.vmem [shape: f32[8,9,9,4], index: 0, kind: input, shape index: {}]
  %s1 = inlined_call_operand.vmem [shape: bf16[9,4,8], index: 1, kind: input, shape index: {}]
  %s2 = inlined_call_operand.vmem [shape: f32[1,8], index: 2, kind: input, shape index: {}]
  %s3 = inlined_call_operand.vmem [shape: bf16[9,8,8], index: 3, kind: input, shape index: {}]
  %s4 = inlined_call_operand.vmem [shape: f32[1,8], index: 4, kind: input, shape index: {}]
  %s5 = inlined_call_operand.vmem [shape: bf16[4,8], index: 5, kind: input, shape index: {}]
  %s6 = inlined_call_operand.vmem [shape: f32[1,8], index: 6, kind: input, shape index: {}]
  %s7 = inlined_call_operand.vmem [shape: f32[2,64,8], index: 7, kind: output, shape index: {}]
  %s8 = sld [smem:[#allocation0]]
  $region61: #{basic_block_forward.1} parent=0
    _
  %s10 = ssub.s32 1, %s8
  %s11 = scalar_select 0, %s10, %s8
  loop: start=0, step=1, limit=4
  $region2: #{basic_block_forward.1} parent=0 // loop_pre_header
    _
  $region3: #{basic_block_forward.1} parent=0 // loop_header
    %s13 = sphi 0, %s17
    %p14 = scmp.ge.s32.totalorder %s13, 4
    %s23 = sphi 0, %s25
    %s26 = sphi 0, %s23
    %s27 = sphi 0, %s26
    %s43 = sphi 0, %s27
    %s47 = sphi 0, %s47
    %s49 = sphi 0, %s47
    %s50 = sphi 0, %s49
    %s64 = sphi 0, %s50
    %s68 = sphi 0, %s68
    %s70 = sphi 0, %s68
    %s71 = sphi 0, %s70
    %s85 = sphi 0, %s71
    %s89 = sphi 0, %s89
    %s91 = sphi 0, %s89
    %s92 = sphi 0, %s91
    %s106 = sphi 0, %s92
    %s110 = sphi 0, %s110
    %s112 = sphi 0, %s110
    %s113 = sphi 0, %s112
    %s127 = sphi 0, %s113
    %s131 = sphi 0, %s131
    %s133 = sphi 0, %s131
    %s134 = sphi 0, %s133
    %s148 = sphi 0, %s134
    %s152 = sphi 0, %s152
    %s154 = sphi 0, %s152
    %s155 = sphi 0, %s154
    %s169 = sphi 0, %s155
    %s175 = sphi 0, %s177
    %s178 = sphi 0, %s175
    %s179 = sphi 0, %s178
    %s195 = sphi 0, %s179
  $region4: #{basic_block_forward.1} parent=0 // loop_header_branch
    %16 = sbr.rel (%p14) target = $region8
  $region5: #{basic_block_forward.1} parent=0 // loop_body
    %s18 = ssub.s32 %s13, 1
    %s19 = ssub.s32 %s13, 2
    %s20 = sadd.s32 %s13, 1
    %s21 = ssub.s32 %s13, %s20
    %p22 = scmp.eq.s32.totalorder %s21, 0
    %s24 = sadd.s32 %s23, 1
    %s25 = scalar_select %p22, %s23, %s24
    %p28 = pneg %p22
    %p29 = scmp.eq.s32.totalorder %s13, 1
    %p30 = por %p28, %p29
    %p31 = scmp.ne.s32.totalorder %s23, %s26
    %p32 = scmp.eq.s32.totalorder %s13, 0
    %p33 = por %p31, %p32
    %p34 = scmp.ne.s32.totalorder %s23, %s26
    %p35 = scmp.eq.s32.totalorder %s18, 1
    %p36 = por %p34, %p35
    %p37 = scmp.ne.s32.totalorder %s26, %s27
    %p38 = scmp.eq.s32.totalorder %s18, 0
    %p39 = por %p37, %p38
    %p40 = scmp.ne.s32.totalorder %s26, %s27
    %p41 = scmp.eq.s32.totalorder %s19, 1
    %p42 = por %p40, %p41
    %p44 = scmp.ne.s32.totalorder %s27, %s43
    %p45 = scmp.eq.s32.totalorder %s19, 0
    %p46 = por %p44, %p45
    %s48 = sadd.s32 %s47, 1
    %p51 = scmp.eq.s32.totalorder %s13, 1
    %p52 = scmp.ne.s32.totalorder %s47, %s49
    %p53 = scmp.eq.s32.totalorder %s13, 0
    %p54 = por %p52, %p53
    %p55 = scmp.ne.s32.totalorder %s47, %s49
    %p56 = scmp.eq.s32.totalorder %s18, 1
    %p57 = por %p55, %p56
    %p58 = scmp.ne.s32.totalorder %s49, %s50
    %p59 = scmp.eq.s32.totalorder %s18, 0
    %p60 = por %p58, %p59
    %p61 = scmp.ne.s32.totalorder %s49, %s50
    %p62 = scmp.eq.s32.totalorder %s19, 1
    %p63 = por %p61, %p62
    %p65 = scmp.ne.s32.totalorder %s50, %s64
    %p66 = scmp.eq.s32.totalorder %s19, 0
    %p67 = por %p65, %p66
    %s69 = sadd.s32 %s68, 1
    %p72 = scmp.eq.s32.totalorder %s13, 1
    %p73 = scmp.ne.s32.totalorder %s68, %s70
    %p74 = scmp.eq.s32.totalorder %s13, 0
    %p75 = por %p73, %p74
    %p76 = scmp.ne.s32.totalorder %s68, %s70
    %p77 = scmp.eq.s32.totalorder %s18, 1
    %p78 = por %p76, %p77
    %p79 = scmp.ne.s32.totalorder %s70, %s71
    %p80 = scmp.eq.s32.totalorder %s18, 0
    %p81 = por %p79, %p80
    %p82 = scmp.ne.s32.totalorder %s70, %s71
    %p83 = scmp.eq.s32.totalorder %s19, 1
    %p84 = por %p82, %p83
    %p86 = scmp.ne.s32.totalorder %s71, %s85
    %p87 = scmp.eq.s32.totalorder %s19, 0
    %p88 = por %p86, %p87
    %s90 = sadd.s32 %s89, 1
    %p93 = scmp.eq.s32.totalorder %s13, 1
    %p94 = scmp.ne.s32.totalorder %s89, %s91
    %p95 = scmp.eq.s32.totalorder %s13, 0
    %p96 = por %p94, %p95
    %p97 = scmp.ne.s32.totalorder %s89, %s91
    %p98 = scmp.eq.s32.totalorder %s18, 1
    %p99 = por %p97, %p98
    %p100 = scmp.ne.s32.totalorder %s91, %s92
    %p101 = scmp.eq.s32.totalorder %s18, 0
    %p102 = por %p100, %p101
    %p103 = scmp.ne.s32.totalorder %s91, %s92
    %p104 = scmp.eq.s32.totalorder %s19, 1
    %p105 = por %p103, %p104
    %p107 = scmp.ne.s32.totalorder %s92, %s106
    %p108 = scmp.eq.s32.totalorder %s19, 0
    %p109 = por %p107, %p108
    %s111 = sadd.s32 %s110, 1
    %p114 = scmp.eq.s32.totalorder %s13, 1
    %p115 = scmp.ne.s32.totalorder %s110, %s112
    %p116 = scmp.eq.s32.totalorder %s13, 0
    %p117 = por %p115, %p116
    %p118 = scmp.ne.s32.totalorder %s110, %s112
    %p119 = scmp.eq.s32.totalorder %s18, 1
    %p120 = por %p118, %p119
    %p121 = scmp.ne.s32.totalorder %s112, %s113
    %p122 = scmp.eq.s32.totalorder %s18, 0
    %p123 = por %p121, %p122
    %p124 = scmp.ne.s32.totalorder %s112, %s113
    %p125 = scmp.eq.s32.totalorder %s19, 1
    %p126 = por %p124, %p125
    %p128 = scmp.ne.s32.totalorder %s113, %s127
    %p129 = scmp.eq.s32.totalorder %s19, 0
    %p130 = por %p128, %p129
    %s132 = sadd.s32 %s131, 1
    %p135 = scmp.eq.s32.totalorder %s13, 1
    %p136 = scmp.ne.s32.totalorder %s131, %s133
    %p137 = scmp.eq.s32.totalorder %s13, 0
    %p138 = por %p136, %p137
    %p139 = scmp.ne.s32.totalorder %s131, %s133
    %p140 = scmp.eq.s32.totalorder %s18, 1
    %p141 = por %p139, %p140
    %p142 = scmp.ne.s32.totalorder %s133, %s134
    %p143 = scmp.eq.s32.totalorder %s18, 0
    %p144 = por %p142, %p143
    %p145 = scmp.ne.s32.totalorder %s133, %s134
    %p146 = scmp.eq.s32.totalorder %s19, 1
    %p147 = por %p145, %p146
    %p149 = scmp.ne.s32.totalorder %s134, %s148
    %p150 = scmp.eq.s32.totalorder %s19, 0
    %p151 = por %p149, %p150
    %s153 = sadd.s32 %s152, 1
    %p156 = scmp.eq.s32.totalorder %s13, 1
    %p157 = scmp.ne.s32.totalorder %s152, %s154
    %p158 = scmp.eq.s32.totalorder %s13, 0
    %p159 = por %p157, %p158
    %p160 = scmp.ne.s32.totalorder %s152, %s154
    %p161 = scmp.eq.s32.totalorder %s18, 1
    %p162 = por %p160, %p161
    %p163 = scmp.ne.s32.totalorder %s154, %s155
    %p164 = scmp.eq.s32.totalorder %s18, 0
    %p165 = por %p163, %p164
    %p166 = scmp.ne.s32.totalorder %s154, %s155
    %p167 = scmp.eq.s32.totalorder %s19, 1
    %p168 = por %p166, %p167
    %p170 = scmp.ne.s32.totalorder %s155, %s169
    %p171 = scmp.eq.s32.totalorder %s19, 0
    %p172 = por %p170, %p171
    %s173 = ssub.s32 %s13, %s20
    %p174 = scmp.eq.s32.totalorder %s173, 0
    %s176 = sadd.s32 %s175, 1
    %s177 = scalar_select %p174, %s175, %s176
    %p180 = pneg %p174
    %p181 = scmp.eq.s32.totalorder %s13, 1
    %p182 = por %p180, %p181
    %p183 = scmp.ne.s32.totalorder %s175, %s178
    %p184 = scmp.eq.s32.totalorder %s13, 0
    %p185 = por %p183, %p184
    %p186 = scmp.ne.s32.totalorder %s175, %s178
    %p187 = scmp.eq.s32.totalorder %s18, 1
    %p188 = por %p186, %p187
    %p189 = scmp.ne.s32.totalorder %s178, %s179
    %p190 = scmp.eq.s32.totalorder %s18, 0
    %p191 = por %p189, %p190
    %p192 = scmp.ne.s32.totalorder %s178, %s179
    %p193 = scmp.eq.s32.totalorder %s19, 1
    %p194 = por %p192, %p193
    %p196 = scmp.ne.s32.totalorder %s179, %s195
    %p197 = scmp.eq.s32.totalorder %s19, 0
    %p198 = por %p196, %p197
    %p199 = scmp.le.s32.totalorder 1, %s13
    %p200 = scmp.lt.s32.totalorder %s13, 3
    %p201 = pnand %p199, %p200
    %p202 = pneg %p201
    // Predicated region
    $region9: #{basic_block_forward.1} parent=5 // pred_check
      _
    $region10: #{basic_block_forward.1} parent=5 // pred_check_branch
      %204 = sbr.rel (%p201) target = $region12
    $region11: #{basic_block_forward.1} parent=5 // pred_region
      %s205 = ssub.s32 %s13, 1
      // Predicated region
      $region13: #{basic_block_forward.1} parent=11 // pred_check
        %p206 = pneg %p60
      $region14: #{basic_block_forward.1} parent=11 // pred_check_branch
        %208 = sbr.rel (%p206) target = $region16
      $region15: #{basic_block_forward.1} parent=11 // pred_region
        _
      $region16: #{basic_block_forward.1} parent=11 // pred_fallthru
        _
      // Predicated region
      $region17: #{basic_block_forward.1} parent=11 // pred_check
        %p209 = pneg %p81
      $region18: #{basic_block_forward.1} parent=11 // pred_check_branch
        %211 = sbr.rel (%p209) target = $region20
      $region19: #{basic_block_forward.1} parent=11 // pred_region
        _
      $region20: #{basic_block_forward.1} parent=11 // pred_fallthru
        _
      // Predicated region
      $region21: #{basic_block_forward.1} parent=11 // pred_check
        %p212 = pneg %p102
      $region22: #{basic_block_forward.1} parent=11 // pred_check_branch
        %214 = sbr.rel (%p212) target = $region24
      $region23: #{basic_block_forward.1} parent=11 // pred_region
        _
      $region24: #{basic_block_forward.1} parent=11 // pred_fallthru
        _
      // Predicated region
      $region25: #{basic_block_forward.1} parent=11 // pred_check
        %p215 = pneg %p123
      $region26: #{basic_block_forward.1} parent=11 // pred_check_branch
        %217 = sbr.rel (%p215) target = $region28
      $region27: #{basic_block_forward.1} parent=11 // pred_region
        _
      $region28: #{basic_block_forward.1} parent=11 // pred_fallthru
        _
      // Predicated region
      $region29: #{basic_block_forward.1} parent=11 // pred_check
        %p218 = pneg %p144
      $region30: #{basic_block_forward.1} parent=11 // pred_check_branch
        %220 = sbr.rel (%p218) target = $region32
      $region31: #{basic_block_forward.1} parent=11 // pred_region
        _
      $region32: #{basic_block_forward.1} parent=11 // pred_fallthru
        _
      // Predicated region
      $region33: #{basic_block_forward.1} parent=11 // pred_check
        %p221 = pneg %p165
      $region34: #{basic_block_forward.1} parent=11 // pred_check_branch
        %223 = sbr.rel (%p221) target = $region36
      $region35: #{basic_block_forward.1} parent=11 // pred_region
        _
      $region36: #{basic_block_forward.1} parent=11 // pred_fallthru
        _
    $region12: #{basic_block_forward.1} parent=5 // pred_fallthru
      _
    %p224 = scmp.lt.s32.totalorder %s13, 2
    // Predicated region
    $region37: #{basic_block_forward.1} parent=5 // pred_check
      %p225 = pneg %p224
    $region38: #{basic_block_forward.1} parent=5 // pred_check_branch
      %227 = sbr.rel (%p225) target = $region40
    $region39: #{basic_block_forward.1} parent=5 // pred_region
      // Predicated region
      $region41: #{basic_block_forward.1} parent=39 // pred_check
        %p228 = pneg %p33
      $region42: #{basic_block_forward.1} parent=39 // pred_check_branch
        %230 = sbr.rel (%p228) target = $region44
      $region43: #{basic_block_forward.1} parent=39 // pred_region
        %s231 = smul.u32 4, %s13
        %p232 = scmp.lt.s32.totalorder %s231, 7
        %s233 = scalar_select %p232, %s231, 7
        %s234 = smul.addr %s233, 18
        %s235 = smul.addr %s234, 8
        %s236 = scalar_lea.vmem %s0, %s235
        %s237 = smul.u32 4, %s13
      $region44: #{basic_block_forward.1} parent=39 // pred_fallthru
        _
    $region40: #{basic_block_forward.1} parent=5 // pred_fallthru
      _
    %p238 = scmp.le.s32.totalorder 1, %s13
    %p239 = scmp.lt.s32.totalorder %s13, 3
    %p240 = pnand %p238, %p239
    %p241 = pneg %p240
    // Predicated region
    $region45: #{basic_block_forward.1} parent=5 // pred_check
      _
    $region46: #{basic_block_forward.1} parent=5 // pred_check_branch
      %243 = sbr.rel (%p240) target = $region48
    $region47: #{basic_block_forward.1} parent=5 // pred_region
      %s244 = ssub.s32 %s13, 1
      %s245 = smul.u32 4, %s18
      %p246 = scmp.lt.s32.totalorder %s245, 7
      %s247 = scalar_select %p246, %s245, 7
      %s248 = smul.addr %s247, 18
      %s249 = smul.addr %s248, 8
      %s250 = scalar_lea.vmem %s0, %s249
      %p251 = pneg %p39
      %p252 = pneg %p36
      %p253 = pneg %p60
      %p254 = pneg %p57
      %p255 = pneg %p81
      %p256 = pneg %p78
      %p257 = pneg %p102
      %p258 = pneg %p99
      %p259 = pneg %p123
      %p260 = pneg %p120
      %p261 = pneg %p144
      %p262 = pneg %p141
      %p263 = pneg %p165
      %p264 = pneg %p162
      %p265 = pneg %p191
      %p266 = pneg %p188
      %p267 = scmp.lt.s32.totalorder %s18, 1
      %s268 = scalar_select %p267, %s18, 1
      %s269 = smul.addr %s268, 8
      %s270 = smul.addr %s269, 8
      %s271 = scalar_lea.vmem %s7, %s270
      %s272 = smul.u32 4, %s18
      %p273 = scmp.lt.s32.totalorder %s272, 7
      %s274 = scalar_select %p273, %s272, 7
      %s275 = smul.addr %s274, 18
      %s276 = smul.addr %s275, 8
      %s277 = scalar_lea.vmem %s0, %s276
      %s278 = smul.u32 4, %s18
      %p279 = scmp.lt.s32.totalorder %s18, 1
      %s280 = scalar_select %p279, %s18, 1
      %s281 = smul.addr %s280, 8
      %s282 = smul.addr %s281, 8
      %s283 = scalar_lea.vmem %s7, %s282
      %v285 = vld [vmem:[%s277] sm:$0xff]
      %v286 = vld [vmem:[%s277 + $0x8] sm:$0x1]
      %v287 = vld [vmem:[%s277 + $0x10] sm:$0xff]
      %v288 = vld [vmem:[%s277 + $0x18] sm:$0x1]
      %v289 = vld [vmem:[%s277 + $0x20] sm:$0xff]
      %v290 = vld [vmem:[%s277 + $0x28] sm:$0x1]
      %v291 = vld [vmem:[%s277 + $0x30] sm:$0xff]
      %v292 = vld [vmem:[%s277 + $0x38] sm:$0x1]
      %v293 = vld [vmem:[%s277 + $0x40] sm:$0xff]
      %v294 = vld [vmem:[%s277 + $0x48] sm:$0x1]
      %v295 = vld [vmem:[%s277 + $0x50] sm:$0xff]
      %v296 = vld [vmem:[%s277 + $0x58] sm:$0x1]
      %v297 = vld [vmem:[%s277 + $0x60] sm:$0xff]
      %v298 = vld [vmem:[%s277 + $0x68] sm:$0x1]
      %v299 = vld [vmem:[%s277 + $0x70] sm:$0xff]
      %v300 = vld [vmem:[%s277 + $0x78] sm:$0x1]
      %v301 = vld [vmem:[%s277 + $0x80] sm:$0xff]
      %v302 = vld [vmem:[%s277 + $0x88] sm:$0x1]
      %s303 = scalar_lea.vmem %s277, 144
      %v304 = vld [vmem:[%s303] sm:$0xff]
      %v305 = vld [vmem:[%s303 + $0x10] sm:$0xff]
      %v306 = vld [vmem:[%s303 + $0x20] sm:$0xff]
      %v307 = vld [vmem:[%s303 + $0x30] sm:$0xff]
      %v308 = vld [vmem:[%s303 + $0x40] sm:$0xff]
      %v309 = vld [vmem:[%s303 + $0x50] sm:$0xff]
      %v310 = vld [vmem:[%s303 + $0x60] sm:$0xff]
      %v311 = vld [vmem:[%s303 + $0x70] sm:$0xff]
      %v312 = vld [vmem:[%s303 + $0x80] sm:$0xff]
      %s313 = scalar_lea.vmem %s277, 288
      %v314 = vld [vmem:[%s313] sm:$0xff]
      %v315 = vld [vmem:[%s313 + $0x8] sm:$0x1]
      %v316 = vld [vmem:[%s313 + $0x10] sm:$0xff]
      %v317 = vld [vmem:[%s313 + $0x18] sm:$0x1]
      %v318 = vld [vmem:[%s313 + $0x20] sm:$0xff]
      %v319 = vld [vmem:[%s313 + $0x28] sm:$0x1]
      %v320 = vld [vmem:[%s313 + $0x30] sm:$0xff]
      %v321 = vld [vmem:[%s313 + $0x38] sm:$0x1]
      %v322 = vld [vmem:[%s313 + $0x40] sm:$0xff]
      %v323 = vld [vmem:[%s313 + $0x48] sm:$0x1]
      %v324 = vld [vmem:[%s313 + $0x50] sm:$0xff]
      %v325 = vld [vmem:[%s313 + $0x58] sm:$0x1]
      %v326 = vld [vmem:[%s313 + $0x60] sm:$0xff]
      %v327 = vld [vmem:[%s313 + $0x68] sm:$0x1]
      %v328 = vld [vmem:[%s313 + $0x70] sm:$0xff]
      %v329 = vld [vmem:[%s313 + $0x78] sm:$0x1]
      %s330 = scalar_lea.vmem %s277, 432
      %v331 = vld [vmem:[%s330] sm:$0xff]
      %v332 = vld [vmem:[%s330 + $0x10] sm:$0xff]
      %v333 = vld [vmem:[%s330 + $0x20] sm:$0xff]
      %v334 = vld [vmem:[%s330 + $0x30] sm:$0xff]
      %v335 = vld [vmem:[%s330 + $0x40] sm:$0xff]
      %v336 = vld [vmem:[%s330 + $0x50] sm:$0xff]
      %v337 = vld [vmem:[%s330 + $0x60] sm:$0xff]
      %v338 = vld [vmem:[%s330 + $0x70] sm:$0xff]
      %v339 = vpack.c.bf16 %v287, %v285
      %v340 = vpack.c.bf16 %v291, %v289
      %v341 = vpack.c.bf16 %v295, %v293
      %v342 = vpack.c.bf16 %v299, %v297
      %v343 = vld [vmem:[%s1] sm:$0x3]
      %v344 = vpack.c.bf16 %v305, %v304
      %v345 = vpack.c.bf16 %v307, %v306
      %v346 = vpack.c.bf16 %v309, %v308
      %v347 = vpack.c.bf16 %v311, %v310
      %s348 = scalar_lea.vmem %s1, 2
      %v349 = vld [vmem:[%s348] sm:$0x3]
      %vm350 = vcmask 31744
      %v352 = vsel %vm350, %v344, 0
      %v355 = vsel %vm350, %v345, 0
      %v358 = vsel %vm350, %v346, 0
      %v361 = vsel %vm350, %v347, 0
      %vm363 = vcmask 1041408
      %v365 = vsel %vm363, %v349, 0
      %367 = vmatprep.subr.bf16.mxu0 0
      %368 = vmatpush1.bf16.msra.mxu0 %v365
      %369 = vmatprep.subr.bf16.mxu0 0
      %370 = vmatpush1.bf16.msra.mxu0 0
      %371 = vmatprep.subr.bf16.mxu0 0
      %372 = vmatpush1.bf16.msra.mxu0 0
      %373 = vmatprep.subr.bf16.mxu0 0
      %374 = vmatpush1.bf16.msra.mxu0 0
      %375 = vmatprep.subr.bf16.mxu0 0
      %376 = vmatpush1.bf16.msra.mxu0 0
      %377 = vmatprep.subr.bf16.mxu0 0
      %378 = vmatpush1.bf16.msra.mxu0 0
      %379 = vmatprep.subr.bf16.mxu0 0
      %380 = vmatpush1.bf16.msra.mxu0 0
      %381 = vmatprep.subr.bf16.mxu0 0
      %382 = vmatpush1.bf16.msra.mxu0 0
      %383 = vmatprep.subr.bf16.mxu0 0
      %384 = vmatpush1.bf16.msra.mxu0 0
      %385 = vmatprep.subr.bf16.mxu0 0
      %386 = vmatpush1.bf16.msra.mxu0 0
      %387 = vmatprep.subr.bf16.mxu0 0
      %388 = vmatpush1.bf16.msra.mxu0 0
      %389 = vmatprep.subr.bf16.mxu0 0
      %390 = vmatpush1.bf16.msra.mxu0 0
      %391 = vmatprep.subr.bf16.mxu0 0
      %392 = vmatpush1.bf16.msra.mxu0 0
      %393 = vmatprep.subr.bf16.mxu0 0
      %394 = vmatpush1.bf16.msra.mxu0 0
      %395 = vmatprep.subr.bf16.mxu0 0
      %396 = vmatpush1.bf16.msra.mxu0 0
      %397 = vmatprep.subr.bf16.mxu0 0
      %398 = vmatpush1.bf16.msra.mxu0 0
      %399 = vmatprep.mubr.bf16.mxu0 0
      %400 = vmatmul.mubr.bf16.gmra.mrb[0].mxu0 %v352
      %v401 = vpop.f32.mrb[0].mxu0
      %v402 = vadd.f32 0.0, %v401
      %v403 = vpop.f32.mrb[0].mxu0
      %v404 = vpop.f32.mrb[0].mxu0
      %v405 = vadd.f32 0.0, %v404
      %v406 = vpop.f32.mrb[0].mxu0
      %407 = vmatprep.mubr.bf16.mxu0 0
      %408 = vmatmul.mubr.bf16.gmra.mrb[0].mxu0 %v355
      %v409 = vpop.f32.mrb[0].mxu0
      %v410 = vadd.f32 0.0, %v409
      %v411 = vpop.f32.mrb[0].mxu0
      %v412 = vpop.f32.mrb[0].mxu0
      %v413 = vadd.f32 0.0, %v412
      %v414 = vpop.f32.mrb[0].mxu0
      %415 = vmatprep.mubr.bf16.mxu0 0
      %416 = vmatmul.mubr.bf16.gmra.mrb[0].mxu0 %v358
      %v417 = vpop.f32.mrb[0].mxu0
      %v418 = vadd.f32 0.0, %v417
      %v419 = vpop.f32.mrb[0].mxu0
      %v420 = vpop.f32.mrb[0].mxu0
      %v421 = vadd.f32 0.0, %v420
      %v422 = vpop.f32.mrb[0].mxu0
      %423 = vmatprep.mubr.bf16.mxu0 0
      %424 = vmatmul.mubr.bf16.gmra.mrb[0].mxu0 %v361
      %v425 = vpop.f32.mrb[0].mxu0
      %v426 = vadd.f32 0.0, %v425
      %v427 = vpop.f32.mrb[0].mxu0
      %v428 = vpop.f32.mrb[0].mxu0
      %v429 = vadd.f32 0.0, %v428
      %v430 = vpop.f32.mrb[0].mxu0
      %431 = vdwg.mxu0
      %v433 = vsel %vm350, %v339, 0
      %v436 = vsel %vm350, %v340, 0
      %v439 = vsel %vm350, %v341, 0
      %v442 = vsel %vm350, %v342, 0
      %v445 = vsel %vm363, %v343, 0
      %447 = vmatprep.subr.bf16.mxu0 0
      %448 = vmatpush1.bf16.msra.mxu0 %v445
      %449 = vmatprep.subr.bf16.mxu0 0
      %450 = vmatpush1.bf16.msra.mxu0 0
      %451 = vmatprep.subr.bf16.mxu0 0
      %452 = vmatpush1.bf16.msra.mxu0 0
      %453 = vmatprep.subr.bf16.mxu0 0
      %454 = vmatpush1.bf16.msra.mxu0 0
      %455 = vmatprep.subr.bf16.mxu0 0
      %456 = vmatpush1.bf16.msra.mxu0 0
      %457 = vmatprep.subr.bf16.mxu0 0
      %458 = vmatpush1.bf16.msra.mxu0 0
      %459 = vmatprep.subr.bf16.mxu0 0
      %460 = vmatpush1.bf16.msra.mxu0 0
      %461 = vmatprep.subr.bf16.mxu0 0
      %462 = vmatpush1.bf16.msra.mxu0 0
      %463 = vmatprep.subr.bf16.mxu0 0
      %464 = vmatpush1.bf16.msra.mxu0 0
      %465 = vmatprep.subr.bf16.mxu0 0
      %466 = vmatpush1.bf16.msra.mxu0 0
      %467 = vmatprep.subr.bf16.mxu0 0
      %468 = vmatpush1.bf16.msra.mxu0 0
      %469 = vmatprep.subr.bf16.mxu0 0
      %470 = vmatpush1.bf16.msra.mxu0 0
      %471 = vmatprep.subr.bf16.mxu0 0
      %472 = vmatpush1.bf16.msra.mxu0 0
      %473 = vmatprep.subr.bf16.mxu0 0
      %474 = vmatpush1.bf16.msra.mxu0 0
      %475 = vmatprep.subr.bf16.mxu0 0
      %476 = vmatpush1.bf16.msra.mxu0 0
      %477 = vmatprep.subr.bf16.mxu0 0
      %478 = vmatpush1.bf16.msra.mxu0 0
      %479 = vmatprep.mubr.bf16.mxu0 0
      %480 = vmatmul.mubr.bf16.gmra.mrb[0].mxu0 %v433
      %v481 = vpop.f32.mrb[0].mxu0
      %v482 = vadd.f32 %v402, %v481
      %v483 = vpop.f32.mrb[0].mxu0
      %v484 = vpop.f32.mrb[0].mxu0
      %v485 = vadd.f32 %v405, %v484
      %v486 = vpop.f32.mrb[0].mxu0
      %487 = vmatprep.mubr.bf16.mxu0 0
      %488 = vmatmul.mubr.bf16.gmra.mrb[0].mxu0 %v436
      %v489 = vpop.f32.mrb[0].mxu0
      %v490 = vadd.f32 %v410, %v489
      %v491 = vpop.f32.mrb[0].mxu0
      %v492 = vpop.f32.mrb[0].mxu0
      %v493 = vadd.f32 %v413, %v492
      %v494 = vpop.f32.mrb[0].mxu0
      %495 = vmatprep.mubr.bf16.mxu0 0
      %496 = vmatmul.mubr.bf16.gmra.mrb[0].mxu0 %v439
      %v497 = vpop.f32.mrb[0].mxu0
      %v498 = vadd.f32 %v418, %v497
      %v499 = vpop.f32.mrb[0].mxu0
      %v500 = vpop.f32.mrb[0].mxu0
      %v501 = vadd.f32 %v421, %v500
      %v502 = vpop.f32.mrb[0].mxu0
      %503 = vmatprep.mubr.bf16.mxu0 0
      %504 = vmatmul.mubr.bf16.gmra.mrb[0].mxu0 %v442
      %v505 = vpop.f32.mrb[0].mxu0
      %v506 = vadd.f32 %v426, %v505
      %v507 = vpop.f32.mrb[0].mxu0
      %v508 = vpop.f32.mrb[0].mxu0
      %v509 = vadd.f32 %v429, %v508
      %v510 = vpop.f32.mrb[0].mxu0
      %511 = vdwg.mxu0
      %vm528 = vcmask 1046528
      %v529 = vrot.slane %v285, 1
      %v530 = vrot.slane %v286, 1
      %v531 = vsel %vm528, %v529, %v530
      %v532 = vrot.slane %v287, 1
      %v533 = vrot.slane %v288, 1
      %v534 = vsel %vm528, %v532, %v533
      %v535 = vrot.slane %v289, 1
      %v536 = vrot.slane %v290, 1
      %v537 = vsel %vm528, %v535, %v536
      %v538 = vrot.slane %v291, 1
      %v539 = vrot.slane %v292, 1
      %v540 = vsel %vm528, %v538, %v539
      %v541 = vrot.slane %v293, 1
      %v542 = vrot.slane %v294, 1
      %v543 = vsel %vm528, %v541, %v542
      %v544 = vrot.slane %v295, 1
      %v545 = vrot.slane %v296, 1
      %v546 = vsel %vm528, %v544, %v545
      %v547 = vrot.slane %v297, 1
      %v548 = vrot.slane %v298, 1
      %v549 = vsel %vm528, %v547, %v548
      %v550 = vrot.slane %v299, 1
      %v551 = vrot.slane %v300, 1
      %v552 = vsel %vm528, %v550, %v551
      %v561 = vpack.c.bf16 %v534, %v531
      %v562 = vpack.c.bf16 %v540, %v537
      %v563 = vpack.c.bf16 %v546, %v543
      %v564 = vpack.c.bf16 %v552, %v549
      %s565 = scalar_lea.vmem %s1, 4
      %v566 = vld [vmem:[%s565] sm:$0x3]
      %v568 = vsel %vm350, %v561, 0
      %v571 = vsel %vm350, %v562, 0
      %v574 = vsel %vm350, %v563, 0
      %v577 = vsel %vm350, %v564, 0
      %v580 = vsel %vm363, %v566, 0
      %582 = vmatprep.subr.bf16.mxu0 0
      %583 = vmatpush1.bf16.msra.mxu0 %v580
      %584 = vmatprep.subr.bf16.mxu0 0
      %585 = vmatpush1.bf16.msra.mxu0 0
      %586 = vmatprep.subr.bf16.mxu0 0
      %587 = vmatpush1.bf16.msra.mxu0 0
      %588 = vmatprep.subr.bf16.mxu0 0
      %589 = vmatpush1.bf16.msra.mxu0 0
      %590 = vmatprep.subr.bf16.mxu0 0
      %591 = vmatpush1.bf16.msra.mxu0 0
      %592 = vmatprep.subr.bf16.mxu0 0
      %593 = vmatpush1.bf16.msra.mxu0 0
      %594 = vmatprep.subr.bf16.mxu0 0
      %595 = vmatpush1.bf16.msra.mxu0 0
      %596 = vmatprep.subr.bf16.mxu0 0
      %597 = vmatpush1.bf16.msra.mxu0 0
      %598 = vmatprep.subr.bf16.mxu0 0
      %599 = vmatpush1.bf16.msra.mxu0 0
      %600 = vmatprep.subr.bf16.mxu0 0
      %601 = vmatpush1.bf16.msra.mxu0 0
      %602 = vmatprep.subr.bf16.mxu0 0
      %603 = vmatpush1.bf16.msra.mxu0 0
      %604 = vmatprep.subr.bf16.mxu0 0
      %605 = vmatpush1.bf16.msra.mxu0 0
      %606 = vmatprep.subr.bf16.mxu0 0
      %607 = vmatpush1.bf16.msra.mxu0 0
      %608 = vmatprep.subr.bf16.mxu0 0
      %609 = vmatpush1.bf16.msra.mxu0 0
      %610 = vmatprep.subr.bf16.mxu0 0
      %611 = vmatpush1.bf16.msra.mxu0 0
      %612 = vmatprep.subr.bf16.mxu0 0
      %613 = vmatpush1.bf16.msra.mxu0 0
      %614 = vmatprep.mubr.bf16.mxu0 0
      %615 = vmatmul.mubr.bf16.gmra.mrb[0].mxu0 %v568
      %v616 = vpop.f32.mrb[0].mxu0
      %v617 = vadd.f32 0.0, %v616
      %v618 = vpop.f32.mrb[0].mxu0
      %v619 = vpop.f32.mrb[0].mxu0
      %v620 = vadd.f32 0.0, %v619
      %v621 = vpop.f32.mrb[0].mxu0
      %622 = vmatprep.mubr.bf16.mxu0 0
      %623 = vmatmul.mubr.bf16.gmra.mrb[0].mxu0 %v571
      %v624 = vpop.f32.mrb[0].mxu0
      %v625 = vadd.f32 0.0, %v624
      %v626 = vpop.f32.mrb[0].mxu0
      %v627 = vpop.f32.mrb[0].mxu0
      %v628 = vadd.f32 0.0, %v627
      %v629 = vpop.f32.mrb[0].mxu0
      %630 = vmatprep.mubr.bf16.mxu0 0
      %631 = vmatmul.mubr.bf16.gmra.mrb[0].mxu0 %v574
      %v632 = vpop.f32.mrb[0].mxu0
      %v633 = vadd.f32 0.0, %v632
      %v634 = vpop.f32.mrb[0].mxu0
      %v635 = vpop.f32.mrb[0].mxu0
      %v636 = vadd.f32 0.0, %v635
      %v637 = vpop.f32.mrb[0].mxu0
      %638 = vmatprep.mubr.bf16.mxu0 0
      %639 = vmatmul.mubr.bf16.gmra.mrb[0].mxu0 %v577
      %v640 = vpop.f32.mrb[0].mxu0
      %v641 = vadd.f32 0.0, %v640
      %v642 = vpop.f32.mrb[0].mxu0
      %v643 = vpop.f32.mrb[0].mxu0
      %v644 = vadd.f32 0.0, %v643
      %v645 = vpop.f32.mrb[0].mxu0
      %646 = vdwg.mxu0
      %v647 = vadd.f32 %v482, %v617
      %v648 = vadd.f32 %v485, %v620
      %v649 = vadd.f32 %v490, %v625
      %v650 = vadd.f32 %v493, %v628
      %v651 = vadd.f32 %v498, %v633
      %v652 = vadd.f32 %v501, %v636
      %v653 = vadd.f32 %v506, %v641
      %v654 = vadd.f32 %v509, %v644
      %v655 = vpack.c.bf16 %v316, %v314
      %v656 = vpack.c.bf16 %v320, %v318
      %v657 = vpack.c.bf16 %v324, %v322
      %v658 = vpack.c.bf16 %v328, %v326
      %s659 = scalar_lea.vmem %s1, 6
      %v660 = vld [vmem:[%s659] sm:$0x3]
      %v662 = vsel %vm350, %v655, 0
      %v665 = vsel %vm350, %v656, 0
      %v668 = vsel %vm350, %v657, 0
      %v671 = vsel %vm350, %v658, 0
      %v674 = vsel %vm363, %v660, 0
      %676 = vmatprep.subr.bf16.mxu0 0
      %677 = vmatpush1.bf16.msra.mxu0 %v674
      %678 = vmatprep.subr.bf16.mxu0 0
      %679 = vmatpush1.bf16.msra.mxu0 0
      %680 = vmatprep.subr.bf16.mxu0 0
      %681 = vmatpush1.bf16.msra.mxu0 0
      %682 = vmatprep.subr.bf16.mxu0 0
      %683 = vmatpush1.bf16.msra.mxu0 0
      %684 = vmatprep.subr.bf16.mxu0 0
      %685 = vmatpush1.bf16.msra.mxu0 0
      %686 = vmatprep.subr.bf16.mxu0 0
      %687 = vmatpush1.bf16.msra.mxu0 0
      %688 = vmatprep.subr.bf16.mxu0 0
      %689 = vmatpush1.bf16.msra.mxu0 0
      %690 = vmatprep.subr.bf16.mxu0 0
      %691 = vmatpush1.bf16.msra.mxu0 0
      %692 = vmatprep.subr.bf16.mxu0 0
      %693 = vmatpush1.bf16.msra.mxu0 0
      %694 = vmatprep.subr.bf16.mxu0 0
      %695 = vmatpush1.bf16.msra.mxu0 0
      %696 = vmatprep.subr.bf16.mxu0 0
      %697 = vmatpush1.bf16.msra.mxu0 0
      %698 = vmatprep.subr.bf16.mxu0 0
      %699 = vmatpush1.bf16.msra.mxu0 0
      %700 = vmatprep.subr.bf16.mxu0 0
      %701 = vmatpush1.bf16.msra.mxu0 0
      %702 = vmatprep.subr.bf16.mxu0 0
      %703 = vmatpush1.bf16.msra.mxu0 0
      %704 = vmatprep.subr.bf16.mxu0 0
      %705 = vmatpush1.bf16.msra.mxu0 0
      %706 = vmatprep.subr.bf16.mxu0 0
      %707 = vmatpush1.bf16.msra.mxu0 0
      %708 = vmatprep.mubr.bf16.mxu0 0
      %709 = vmatmul.mubr.bf16.gmra.mrb[0].mxu0 %v662
      %v710 = vpop.f32.mrb[0].mxu0
      %v711 = vadd.f32 0.0, %v710
      %v712 = vpop.f32.mrb[0].mxu0
      %v713 = vpop.f32.mrb[0].mxu0
      %v714 = vadd.f32 0.0, %v713
      %v715 = vpop.f32.mrb[0].mxu0
      %716 = vmatprep.mubr.bf16.mxu0 0
      %717 = vmatmul.mubr.bf16.gmra.mrb[0].mxu0 %v665
      %v718 = vpop.f32.mrb[0].mxu0
      %v719 = vadd.f32 0.0, %v718
      %v720 = vpop.f32.mrb[0].mxu0
      %v721 = vpop.f32.mrb[0].mxu0
      %v722 = vadd.f32 0.0, %v721
      %v723 = vpop.f32.mrb[0].mxu0
      %724 = vmatprep.mubr.bf16.mxu0 0
      %725 = vmatmul.mubr.bf16.gmra.mrb[0].mxu0 %v668
      %v726 = vpop.f32.mrb[0].mxu0
      %v727 = vadd.f32 0.0, %v726
      %v728 = vpop.f32.mrb[0].mxu0
      %v729 = vpop.f32.mrb[0].mxu0
      %v730 = vadd.f32 0.0, %v729
      %v731 = vpop.f32.mrb[0].mxu0
      %732 = vmatprep.mubr.bf16.mxu0 0
      %733 = vmatmul.mubr.bf16.gmra.mrb[0].mxu0 %v671
      %v734 = vpop.f32.mrb[0].mxu0
      %v735 = vadd.f32 0.0, %v734
      %v736 = vpop.f32.mrb[0].mxu0
      %v737 = vpop.f32.mrb[0].mxu0
      %v738 = vadd.f32 0.0, %v737
      %v739 = vpop.f32.mrb[0].mxu0
      %740 = vdwg.mxu0
      %v741 = vadd.f32 %v647, %v711
      %v742 = vadd.f32 %v648, %v714
      %v743 = vadd.f32 %v649, %v719
      %v744 = vadd.f32 %v650, %v722
      %v745 = vadd.f32 %v651, %v727
      %v746 = vadd.f32 %v652, %v730
      %v747 = vadd.f32 %v653, %v735
      %v748 = vadd.f32 %v654, %v738
      %v749 = vpack.c.bf16 %v332, %v331
      %v750 = vpack.c.bf16 %v334, %v333
      %v751 = vpack.c.bf16 %v336, %v335
      %v752 = vpack.c.bf16 %v338, %v337
      %s753 = scalar_lea.vmem %s1, 8
      %v754 = vld [vmem:[%s753] sm:$0x3]
      %v756 = vsel %vm350, %v749, 0
      %v759 = vsel %vm350, %v750, 0
      %v762 = vsel %vm350, %v751, 0
      %v765 = vsel %vm350, %v752, 0
      %v768 = vsel %vm363, %v754, 0
      %770 = vmatprep.subr.bf16.mxu0 0
      %771 = vmatpush1.bf16.msra.mxu0 %v768
      %772 = vmatprep.subr.bf16.mxu0 0
      %773 = vmatpush1.bf16.msra.mxu0 0
      %774 = vmatprep.subr.bf16.mxu0 0
      %775 = vmatpush1.bf16.msra.mxu0 0
      %776 = vmatprep.subr.bf16.mxu0 0
      %777 = vmatpush1.bf16.msra.mxu0 0
      %778 = vmatprep.subr.bf16.mxu0 0
      %779 = vmatpush1.bf16.msra.mxu0 0
      %780 = vmatprep.subr.bf16.mxu0 0
      %781 = vmatpush1.bf16.msra.mxu0 0
      %782 = vmatprep.subr.bf16.mxu0 0
      %783 = vmatpush1.bf16.msra.mxu0 0
      %784 = vmatprep.subr.bf16.mxu0 0
      %785 = vmatpush1.bf16.msra.mxu0 0
      %786 = vmatprep.subr.bf16.mxu0 0
      %787 = vmatpush1.bf16.msra.mxu0 0
      %788 = vmatprep.subr.bf16.mxu0 0
      %789 = vmatpush1.bf16.msra.mxu0 0
      %790 = vmatprep.subr.bf16.mxu0 0
      %791 = vmatpush1.bf16.msra.mxu0 0
      %792 = vmatprep.subr.bf16.mxu0 0
      %793 = vmatpush1.bf16.msra.mxu0 0
      %794 = vmatprep.subr.bf16.mxu0 0
      %795 = vmatpush1.bf16.msra.mxu0 0
      %796 = vmatprep.subr.bf16.mxu0 0
      %797 = vmatpush1.bf16.msra.mxu0 0
      %798 = vmatprep.subr.bf16.mxu0 0
      %799 = vmatpush1.bf16.msra.mxu0 0
      %800 = vmatprep.subr.bf16.mxu0 0
      %801 = vmatpush1.bf16.msra.mxu0 0
      %802 = vmatprep.mubr.bf16.mxu0 0
      %803 = vmatmul.mubr.bf16.gmra.mrb[0].mxu0 %v756
      %v804 = vpop.f32.mrb[0].mxu0
      %v805 = vadd.f32 0.0, %v804
      %v806 = vpop.f32.mrb[0].mxu0
      %v807 = vpop.f32.mrb[0].mxu0
      %v808 = vadd.f32 0.0, %v807
      %v809 = vpop.f32.mrb[0].mxu0
      %810 = vmatprep.mubr.bf16.mxu0 0
      %811 = vmatmul.mubr.bf16.gmra.mrb[0].mxu0 %v759
      %v812 = vpop.f32.mrb[0].mxu0
      %v813 = vadd.f32 0.0, %v812
      %v814 = vpop.f32.mrb[0].mxu0
      %v815 = vpop.f32.mrb[0].mxu0
      %v816 = vadd.f32 0.0, %v815
      %v817 = vpop.f32.mrb[0].mxu0
      %818 = vmatprep.mubr.bf16.mxu0 0
      %819 = vmatmul.mubr.bf16.gmra.mrb[0].mxu0 %v762
      %v820 = vpop.f32.mrb[0].mxu0
      %v821 = vadd.f32 0.0, %v820
      %v822 = vpop.f32.mrb[0].mxu0
      %v823 = vpop.f32.mrb[0].mxu0
      %v824 = vadd.f32 0.0, %v823
      %v825 = vpop.f32.mrb[0].mxu0
      %826 = vmatprep.mubr.bf16.mxu0 0
      %827 = vmatmul.mubr.bf16.gmra.mrb[0].mxu0 %v765
      %v828 = vpop.f32.mrb[0].mxu0
      %v829 = vadd.f32 0.0, %v828
      %v830 = vpop.f32.mrb[0].mxu0
      %v831 = vpop.f32.mrb[0].mxu0
      %v832 = vadd.f32 0.0, %v831
      %v833 = vpop.f32.mrb[0].mxu0
      %834 = vdwg.mxu0
      %v835 = vadd.f32 %v741, %v805
      %v836 = vadd.f32 %v742, %v808
      %v837 = vadd.f32 %v743, %v813
      %v838 = vadd.f32 %v744, %v816
      %v839 = vadd.f32 %v745, %v821
      %v840 = vadd.f32 %v746, %v824
      %v841 = vadd.f32 %v747, %v829
      %v842 = vadd.f32 %v748, %v832
      %v859 = vrot.slane %v314, 1
      %v860 = vrot.slane %v315, 1
      %v861 = vsel %vm528, %v859, %v860
      %v862 = vrot.slane %v316, 1
      %v863 = vrot.slane %v317, 1
      %v864 = vsel %vm528, %v862, %v863
      %v865 = vrot.slane %v318, 1
      %v866 = vrot.slane %v319, 1
      %v867 = vsel %vm528, %v865, %v866
      %v868 = vrot.slane %v320, 1
      %v869 = vrot.slane %v321, 1
      %v870 = vsel %vm528, %v868, %v869
      %v871 = vrot.slane %v322, 1
      %v872 = vrot.slane %v323, 1
      %v873 = vsel %vm528, %v871, %v872
      %v874 = vrot.slane %v324, 1
      %v875 = vrot.slane %v325, 1
      %v876 = vsel %vm528, %v874, %v875
      %v877 = vrot.slane %v326, 1
      %v878 = vrot.slane %v327, 1
      %v879 = vsel %vm528, %v877, %v878
      %v880 = vrot.slane %v328, 1
      %v881 = vrot.slane %v329, 1
      %v882 = vsel %vm528, %v880, %v881
      %v891 = vpack.c.bf16 %v864, %v861
      %v892 = vpack.c.bf16 %v870, %v867
      %v893 = vpack.c.bf16 %v876, %v873
      %v894 = vpack.c.bf16 %v882, %v879
      %s895 = scalar_lea.vmem %s1, 10
      %v896 = vld [vmem:[%s895] sm:$0x3]
      %v898 = vsel %vm350, %v891, 0
      %v901 = vsel %vm350, %v892, 0
      %v904 = vsel %vm350, %v893, 0
      %v907 = vsel %vm350, %v894, 0
      %v910 = vsel %vm363, %v896, 0
      %912 = vmatprep.subr.bf16.mxu0 0
      %913 = vmatpush1.bf16.msra.mxu0 %v910
      %914 = vmatprep.subr.bf16.mxu0 0
      %915 = vmatpush1.bf16.msra.mxu0 0
      %916 = vmatprep.subr.bf16.mxu0 0
      %917 = vmatpush1.bf16.msra.mxu0 0
      %918 = vmatprep.subr.bf16.mxu0 0
      %919 = vmatpush1.bf16.msra.mxu0 0
      %920 = vmatprep.subr.bf16.mxu0 0
      %921 = vmatpush1.bf16.msra.mxu0 0
      %922 = vmatprep.subr.bf16.mxu0 0
      %923 = vmatpush1.bf16.msra.mxu0 0
      %924 = vmatprep.subr.bf16.mxu0 0
      %925 = vmatpush1.bf16.msra.mxu0 0
      %926 = vmatprep.subr.bf16.mxu0 0
      %927 = vmatpush1.bf16.msra.mxu0 0
      %928 = vmatprep.subr.bf16.mxu0 0
      %929 = vmatpush1.bf16.msra.mxu0 0
      %930 = vmatprep.subr.bf16.mxu0 0
      %931 = vmatpush1.bf16.msra.mxu0 0
      %932 = vmatprep.subr.bf16.mxu0 0
      %933 = vmatpush1.bf16.msra.mxu0 0
      %934 = vmatprep.subr.bf16.mxu0 0
      %935 = vmatpush1.bf16.msra.mxu0 0
      %936 = vmatprep.subr.bf16.mxu0 0
      %937 = vmatpush1.bf16.msra.mxu0 0
      %938 = vmatprep.subr.bf16.mxu0 0
      %939 = vmatpush1.bf16.msra.mxu0 0
      %940 = vmatprep.subr.bf16.mxu0 0
      %941 = vmatpush1.bf16.msra.mxu0 0
      %942 = vmatprep.subr.bf16.mxu0 0
      %943 = vmatpush1.bf16.msra.mxu0 0
      %944 = vmatprep.mubr.bf16.mxu0 0
      %945 = vmatmul.mubr.bf16.gmra.mrb[0].mxu0 %v898
      %v946 = vpop.f32.mrb[0].mxu0
      %v947 = vadd.f32 0.0, %v946
      %v948 = vpop.f32.mrb[0].mxu0
      %v949 = vpop.f32.mrb[0].mxu0
      %v950 = vadd.f32 0.0, %v949
      %v951 = vpop.f32.mrb[0].mxu0
      %952 = vmatprep.mubr.bf16.mxu0 0
      %953 = vmatmul.mubr.bf16.gmra.mrb[0].mxu0 %v901
      %v954 = vpop.f32.mrb[0].mxu0
      %v955 = vadd.f32 0.0, %v954
      %v956 = vpop.f32.mrb[0].mxu0
      %v957 = vpop.f32.mrb[0].mxu0
      %v958 = vadd.f32 0.0, %v957
      %v959 = vpop.f32.mrb[0].mxu0
      %960 = vmatprep.mubr.bf16.mxu0 0
      %961 = vmatmul.mubr.bf16.gmra.mrb[0].mxu0 %v904
      %v962 = vpop.f32.mrb[0].mxu0
      %v963 = vadd.f32 0.0, %v962
      %v964 = vpop.f32.mrb[0].mxu0
      %v965 = vpop.f32.mrb[0].mxu0
      %v966 = vadd.f32 0.0, %v965
      %v967 = vpop.f32.mrb[0].mxu0
      %968 = vmatprep.mubr.bf16.mxu0 0
      %969 = vmatmul.mubr.bf16.gmra.mrb[0].mxu0 %v907
      %v970 = vpop.f32.mrb[0].mxu0
      %v971 = vadd.f32 0.0, %v970
      %v972 = vpop.f32.mrb[0].mxu0
      %v973 = vpop.f32.mrb[0].mxu0
      %v974 = vadd.f32 0.0, %v973
      %v975 = vpop.f32.mrb[0].mxu0
      %976 = vdwg.mxu0
      %v977 = vadd.f32 %v835, %v947
      %v978 = vadd.f32 %v836, %v950
      %v979 = vadd.f32 %v837, %v955
      %v980 = vadd.f32 %v838, %v958
      %v981 = vadd.f32 %v839, %v963
      %v982 = vadd.f32 %v840, %v966
      %v983 = vadd.f32 %v841, %v971
      %v984 = vadd.f32 %v842, %v974
      %v985 = vpack.c.bf16 %v289, %v287
      %v986 = vpack.c.bf16 %v293, %v291
      %v987 = vpack.c.bf16 %v297, %v295
      %v988 = vpack.c.bf16 %v301, %v299
      %s989 = scalar_lea.vmem %s1, 12
      %v990 = vld [vmem:[%s989] sm:$0x3]
      %v992 = vsel %vm350, %v985, 0
      %v995 = vsel %vm350, %v986, 0
      %v998 = vsel %vm350, %v987, 0
      %v1001 = vsel %vm350, %v988, 0
      %v1004 = vsel %vm363, %v990, 0
      %1006 = vmatprep.subr.bf16.mxu0 0
      %1007 = vmatpush1.bf16.msra.mxu0 %v1004
      %1008 = vmatprep.subr.bf16.mxu0 0
      %1009 = vmatpush1.bf16.msra.mxu0 0
      %1010 = vmatprep.subr.bf16.mxu0 0
      %1011 = vmatpush1.bf16.msra.mxu0 0
      %1012 = vmatprep.subr.bf16.mxu0 0
      %1013 = vmatpush1.bf16.msra.mxu0 0
      %1014 = vmatprep.subr.bf16.mxu0 0
      %1015 = vmatpush1.bf16.msra.mxu0 0
      %1016 = vmatprep.subr.bf16.mxu0 0
      %1017 = vmatpush1.bf16.msra.mxu0 0
      %1018 = vmatprep.subr.bf16.mxu0 0
      %1019 = vmatpush1.bf16.msra.mxu0 0
      %1020 = vmatprep.subr.bf16.mxu0 0
      %1021 = vmatpush1.bf16.msra.mxu0 0
      %1022 = vmatprep.subr.bf16.mxu0 0
      %1023 = vmatpush1.bf16.msra.mxu0 0
      %1024 = vmatprep.subr.bf16.mxu0 0
      %1025 = vmatpush1.bf16.msra.mxu0 0
      %1026 = vmatprep.subr.bf16.mxu0 0
      %1027 = vmatpush1.bf16.msra.mxu0 0
      %1028 = vmatprep.subr.bf16.mxu0 0
      %1029 = vmatpush1.bf16.msra.mxu0 0
      %1030 = vmatprep.subr.bf16.mxu0 0
      %1031 = vmatpush1.bf16.msra.mxu0 0
      %1032 = vmatprep.subr.bf16.mxu0 0
      %1033 = vmatpush1.bf16.msra.mxu0 0
      %1034 = vmatprep.subr.bf16.mxu0 0
      %1035 = vmatpush1.bf16.msra.mxu0 0
      %1036 = vmatprep.subr.bf16.mxu0 0
      %1037 = vmatpush1.bf16.msra.mxu0 0
      %1038 = vmatprep.mubr.bf16.mxu0 0
      %1039 = vmatmul.mubr.bf16.gmra.mrb[0].mxu0 %v992
      %v1040 = vpop.f32.mrb[0].mxu0
      %v1041 = vadd.f32 0.0, %v1040
      %v1042 = vpop.f32.mrb[0].mxu0
      %v1043 = vpop.f32.mrb[0].mxu0
      %v1044 = vadd.f32 0.0, %v1043
      %v1045 = vpop.f32.mrb[0].mxu0
      %1046 = vmatprep.mubr.bf16.mxu0 0
      %1047 = vmatmul.mubr.bf16.gmra.mrb[0].mxu0 %v995
      %v1048 = vpop.f32.mrb[0].mxu0
      %v1049 = vadd.f32 0.0, %v1048
      %v1050 = vpop.f32.mrb[0].mxu0
      %v1051 = vpop.f32.mrb[0].mxu0
      %v1052 = vadd.f32 0.0, %v1051
      %v1053 = vpop.f32.mrb[0].mxu0
      %1054 = vmatprep.mubr.bf16.mxu0 0
      %1055 = vmatmul.mubr.bf16.gmra.mrb[0].mxu0 %v998
      %v1056 = vpop.f32.mrb[0].mxu0
      %v1057 = vadd.f32 0.0, %v1056
      %v1058 = vpop.f32.mrb[0].mxu0
      %v1059 = vpop.f32.mrb[0].mxu0
      %v1060 = vadd.f32 0.0, %v1059
      %v1061 = vpop.f32.mrb[0].mxu0
      %1062 = vmatprep.mubr.bf16.mxu0 0
      %1063 = vmatmul.mubr.bf16.gmra.mrb[0].mxu0 %v1001
      %v1064 = vpop.f32.mrb[0].mxu0
      %v1065 = vadd.f32 0.0, %v1064
      %v1066 = vpop.f32.mrb[0].mxu0
      %v1067 = vpop.f32.mrb[0].mxu0
      %v1068 = vadd.f32 0.0, %v1067
      %v1069 = vpop.f32.mrb[0].mxu0
      %1070 = vdwg.mxu0
      %v1071 = vadd.f32 %v977, %v1041
      %v1072 = vadd.f32 %v978, %v1044
      %v1073 = vadd.f32 %v979, %v1049
      %v1074 = vadd.f32 %v980, %v1052
      %v1075 = vadd.f32 %v981, %v1057
      %v1076 = vadd.f32 %v982, %v1060
      %v1077 = vadd.f32 %v983, %v1065
      %v1078 = vadd.f32 %v984, %v1068
      %v1079 = vpack.c.bf16 %v306, %v305
      %v1080 = vpack.c.bf16 %v308, %v307
      %v1081 = vpack.c.bf16 %v310, %v309
      %v1082 = vpack.c.bf16 %v312, %v311
      %s1083 = scalar_lea.vmem %s1, 14
      %v1084 = vld [vmem:[%s1083] sm:$0x3]
      %v1086 = vsel %vm350, %v1079, 0
      %v1089 = vsel %vm350, %v1080, 0
      %v1092 = vsel %vm350, %v1081, 0
      %v1095 = vsel %vm350, %v1082, 0
      %v1098 = vsel %vm363, %v1084, 0
      %1100 = vmatprep.subr.bf16.mxu0 0
      %1101 = vmatpush1.bf16.msra.mxu0 %v1098
      %1102 = vmatprep.subr.bf16.mxu0 0
      %1103 = vmatpush1.bf16.msra.mxu0 0
      %1104 = vmatprep.subr.bf16.mxu0 0
      %1105 = vmatpush1.bf16.msra.mxu0 0
      %1106 = vmatprep.subr.bf16.mxu0 0
      %1107 = vmatpush1.bf16.msra.mxu0 0
      %1108 = vmatprep.subr.bf16.mxu0 0
      %1109 = vmatpush1.bf16.msra.mxu0 0
      %1110 = vmatprep.subr.bf16.mxu0 0
      %1111 = vmatpush1.bf16.msra.mxu0 0
      %1112 = vmatprep.subr.bf16.mxu0 0
      %1113 = vmatpush1.bf16.msra.mxu0 0
      %1114 = vmatprep.subr.bf16.mxu0 0
      %1115 = vmatpush1.bf16.msra.mxu0 0
      %1116 = vmatprep.subr.bf16.mxu0 0
      %1117 = vmatpush1.bf16.msra.mxu0 0
      %1118 = vmatprep.subr.bf16.mxu0 0
      %1119 = vmatpush1.bf16.msra.mxu0 0
      %1120 = vmatprep.subr.bf16.mxu0 0
      %1121 = vmatpush1.bf16.msra.mxu0 0
      %1122 = vmatprep.subr.bf16.mxu0 0
      %1123 = vmatpush1.bf16.msra.mxu0 0
      %1124 = vmatprep.subr.bf16.mxu0 0
      %1125 = vmatpush1.bf16.msra.mxu0 0
      %1126 = vmatprep.subr.bf16.mxu0 0
      %1127 = vmatpush1.bf16.msra.mxu0 0
      %1128 = vmatprep.subr.bf16.mxu0 0
      %1129 = vmatpush1.bf16.msra.mxu0 0
      %1130 = vmatprep.subr.bf16.mxu0 0
      %1131 = vmatpush1.bf16.msra.mxu0 0
      %1132 = vmatprep.mubr.bf16.mxu0 0
      %1133 = vmatmul.mubr.bf16.gmra.mrb[0].mxu0 %v1086
      %v1134 = vpop.f32.mrb[0].mxu0
      %v1135 = vadd.f32 0.0, %v1134
      %v1136 = vpop.f32.mrb[0].mxu0
      %v1137 = vpop.f32.mrb[0].mxu0
      %v1138 = vadd.f32 0.0, %v1137
      %v1139 = vpop.f32.mrb[0].mxu0
      %1140 = vmatprep.mubr.bf16.mxu0 0
      %1141 = vmatmul.mubr.bf16.gmra.mrb[0].mxu0 %v1089
      %v1142 = vpop.f32.mrb[0].mxu0
      %v1143 = vadd.f32 0.0, %v1142
      %v1144 = vpop.f32.mrb[0].mxu0
      %v1145 = vpop.f32.mrb[0].mxu0
      %v1146 = vadd.f32 0.0, %v1145
      %v1147 = vpop.f32.mrb[0].mxu0
      %1148 = vmatprep.mubr.bf16.mxu0 0
      %1149 = vmatmul.mubr.bf16.gmra.mrb[0].mxu0 %v1092
      %v1150 = vpop.f32.mrb[0].mxu0
      %v1151 = vadd.f32 0.0, %v1150
      %v1152 = vpop.f32.mrb[0].mxu0
      %v1153 = vpop.f32.mrb[0].mxu0
      %v1154 = vadd.f32 0.0, %v1153
      %v1155 = vpop.f32.mrb[0].mxu0
      %1156 = vmatprep.mubr.bf16.mxu0 0
      %1157 = vmatmul.mubr.bf16.gmra.mrb[0].mxu0 %v1095
      %v1158 = vpop.f32.mrb[0].mxu0
      %v1159 = vadd.f32 0.0, %v1158
      %v1160 = vpop.f32.mrb[0].mxu0
      %v1161 = vpop.f32.mrb[0].mxu0
      %v1162 = vadd.f32 0.0, %v1161
      %v1163 = vpop.f32.mrb[0].mxu0
      %1164 = vdwg.mxu0
      %v1165 = vadd.f32 %v1071, %v1135
      %v1166 = vadd.f32 %v1072, %v1138
      %v1167 = vadd.f32 %v1073, %v1143
      %v1168 = vadd.f32 %v1074, %v1146
      %v1169 = vadd.f32 %v1075, %v1151
      %v1170 = vadd.f32 %v1076, %v1154
      %v1171 = vadd.f32 %v1077, %v1159
      %v1172 = vadd.f32 %v1078, %v1162
      %v1175 = vrot.slane %v301, 1
      %v1176 = vrot.slane %v302, 1
      %v1177 = vsel %vm528, %v1175, %v1176
      %v1179 = vpack.c.bf16 %v537, %v534
      %v1180 = vpack.c.bf16 %v543, %v540
      %v1181 = vpack.c.bf16 %v549, %v546
      %v1182 = vpack.c.bf16 %v1177, %v552
      %s1183 = scalar_lea.vmem %s1, 16
      %v1184 = vld [vmem:[%s1183] sm:$0x3]
      %v1186 = vsel %vm350, %v1179, 0
      %v1189 = vsel %vm350, %v1180, 0
      %v1192 = vsel %vm350, %v1181, 0
      %v1195 = vsel %vm350, %v1182, 0
      %v1198 = vsel %vm363, %v1184, 0
      %1200 = vmatprep.subr.bf16.mxu0 0
      %1201 = vmatpush1.bf16.msra.mxu0 %v1198
      %1202 = vmatprep.subr.bf16.mxu0 0
      %1203 = vmatpush1.bf16.msra.mxu0 0
      %1204 = vmatprep.subr.bf16.mxu0 0
      %1205 = vmatpush1.bf16.msra.mxu0 0
      %1206 = vmatprep.subr.bf16.mxu0 0
      %1207 = vmatpush1.bf16.msra.mxu0 0
      %1208 = vmatprep.subr.bf16.mxu0 0
      %1209 = vmatpush1.bf16.msra.mxu0 0
      %1210 = vmatprep.subr.bf16.mxu0 0
      %1211 = vmatpush1.bf16.msra.mxu0 0
      %1212 = vmatprep.subr.bf16.mxu0 0
      %1213 = vmatpush1.bf16.msra.mxu0 0
      %1214 = vmatprep.subr.bf16.mxu0 0
      %1215 = vmatpush1.bf16.msra.mxu0 0
      %1216 = vmatprep.subr.bf16.mxu0 0
      %1217 = vmatpush1.bf16.msra.mxu0 0
      %1218 = vmatprep.subr.bf16.mxu0 0
      %1219 = vmatpush1.bf16.msra.mxu0 0
      %1220 = vmatprep.subr.bf16.mxu0 0
      %1221 = vmatpush1.bf16.msra.mxu0 0
      %1222 = vmatprep.subr.bf16.mxu0 0
      %1223 = vmatpush1.bf16.msra.mxu0 0
      %1224 = vmatprep.subr.bf16.mxu0 0
      %1225 = vmatpush1.bf16.msra.mxu0 0
      %1226 = vmatprep.subr.bf16.mxu0 0
      %1227 = vmatpush1.bf16.msra.mxu0 0
      %1228 = vmatprep.subr.bf16.mxu0 0
      %1229 = vmatpush1.bf16.msra.mxu0 0
      %1230 = vmatprep.subr.bf16.mxu0 0
      %1231 = vmatpush1.bf16.msra.mxu0 0
      %1232 = vmatprep.mubr.bf16.mxu0 0
      %1233 = vmatmul.mubr.bf16.gmra.mrb[0].mxu0 %v1186
      %v1234 = vpop.f32.mrb[0].mxu0
      %v1235 = vadd.f32 0.0, %v1234
      %v1236 = vpop.f32.mrb[0].mxu0
      %v1237 = vpop.f32.mrb[0].mxu0
      %v1238 = vadd.f32 0.0, %v1237
      %v1239 = vpop.f32.mrb[0].mxu0
      %1240 = vmatprep.mubr.bf16.mxu0 0
      %1241 = vmatmul.mubr.bf16.gmra.mrb[0].mxu0 %v1189
      %v1242 = vpop.f32.mrb[0].mxu0
      %v1243 = vadd.f32 0.0, %v1242
      %v1244 = vpop.f32.mrb[0].mxu0
      %v1245 = vpop.f32.mrb[0].mxu0
      %v1246 = vadd.f32 0.0, %v1245
      %v1247 = vpop.f32.mrb[0].mxu0
      %1248 = vmatprep.mubr.bf16.mxu0 0
      %1249 = vmatmul.mubr.bf16.gmra.mrb[0].mxu0 %v1192
      %v1250 = vpop.f32.mrb[0].mxu0
      %v1251 = vadd.f32 0.0, %v1250
      %v1252 = vpop.f32.mrb[0].mxu0
      %v1253 = vpop.f32.mrb[0].mxu0
      %v1254 = vadd.f32 0.0, %v1253
      %v1255 = vpop.f32.mrb[0].mxu0
      %1256 = vmatprep.mubr.bf16.mxu0 0
      %1257 = vmatmul.mubr.bf16.gmra.mrb[0].mxu0 %v1195
      %v1258 = vpop.f32.mrb[0].mxu0
      %v1259 = vadd.f32 0.0, %v1258
      %v1260 = vpop.f32.mrb[0].mxu0
      %v1261 = vpop.f32.mrb[0].mxu0
      %v1262 = vadd.f32 0.0, %v1261
      %v1263 = vpop.f32.mrb[0].mxu0
      %1264 = vdwg.mxu0
      %v1265 = vadd.f32 %v1165, %v1235
      %v1266 = vadd.f32 %v1166, %v1238
      %v1267 = vadd.f32 %v1167, %v1243
      %v1268 = vadd.f32 %v1168, %v1246
      %v1269 = vadd.f32 %v1169, %v1251
      %v1270 = vadd.f32 %v1170, %v1254
      %v1271 = vadd.f32 %v1171, %v1259
      %v1272 = vadd.f32 %v1172, %v1262
      %v1273 = vld [vmem:[%s2] sm:$0x1]
      %v1275 = vlaneseq
      %v1276 = vshrl.u32 %v1275, 7
      %v1277 = vsub.s32 0, %v1276
      %v1278 = vrot.slane %v1273, %v1277
      %v1280 = vadd.f32 %v1265, %v1278
      %v1281 = vadd.f32 %v1266, %v1278
      %v1282 = vadd.f32 %v1267, %v1278
      %v1283 = vadd.f32 %v1268, %v1278
      %v1284 = vadd.f32 %v1269, %v1278
      %v1285 = vadd.f32 %v1270, %v1278
      %v1286 = vadd.f32 %v1271, %v1278
      %v1287 = vadd.f32 %v1272, %v1278
      %v1288 = vmax.f32 %v1280, 0.0
      %v1289 = vmax.f32 %v1281, 0.0
      %v1290 = vmax.f32 %v1282, 0.0
      %v1291 = vmax.f32 %v1283, 0.0
      %v1292 = vmax.f32 %v1284, 0.0
      %v1293 = vmax.f32 %v1285, 0.0
      %v1294 = vmax.f32 %v1286, 0.0
      %v1295 = vmax.f32 %v1287, 0.0
      %vm1296 = vcmask 64512
      %1297 = vst.msk [vmem:[#allocation2] sm:$0xff] %vm1296, 0.0
      %vm1298 = vcmask 58368
      %1299 = vst.msk [vmem:[#allocation2 + $0x8] sm:$0x3] %vm1298, 0.0
      %1300 = vst.msk [vmem:[#allocation2 + $0x10] sm:$0xff] %vm1296, 0.0
      %1301 = vst.msk [vmem:[#allocation2 + $0x18] sm:$0x3] %vm1298, 0.0
      %1302 = vst.msk [vmem:[#allocation2 + $0x20] sm:$0xff] %vm1296, 0.0
      %1303 = vst.msk [vmem:[#allocation2 + $0x28] sm:$0x3] %vm1298, 0.0
      %1304 = vst.msk [vmem:[#allocation2 + $0x30] sm:$0xff] %vm1296, 0.0
      %1305 = vst.msk [vmem:[#allocation2 + $0x38] sm:$0x3] %vm1298, 0.0
      %1306 = vst.msk [vmem:[#allocation2 + $0x40] sm:$0xff] %vm1296, 0.0
      %1307 = vst.msk [vmem:[#allocation2 + $0x48] sm:$0x3] %vm1298, 0.0
      %1308 = vst.msk [vmem:[#allocation2 + $0x50] sm:$0xff] %vm1296, 0.0
      %1309 = vst.msk [vmem:[#allocation2 + $0x58] sm:$0x3] %vm1298, 0.0
      %1310 = vst.msk [vmem:[#allocation2 + $0x60] sm:$0xff] %vm1296, 0.0
      %1311 = vst.msk [vmem:[#allocation2 + $0x68] sm:$0x3] %vm1298, 0.0
      %1312 = vst.msk [vmem:[#allocation2 + $0x70] sm:$0xff] %vm1296, 0.0
      %1313 = vst.msk [vmem:[#allocation2 + $0x78] sm:$0x3] %vm1298, 0.0
      %1314 = vst.msk [vmem:[#allocation2 + $0x80] sm:$0xff] %vm1296, 0.0
      %1315 = vst.msk [vmem:[#allocation2 + $0x88] sm:$0x3] %vm1298, 0.0
      %1316 = vst.msk [vmem:[#allocation2 + $0x90] sm:$0xff] %vm1296, 0.0
      %1317 = vst.msk [vmem:[#allocation2 + $0x98] sm:$0x3] %vm1298, 0.0
      %s1318 = scalar_lea.vmem [#allocation2], 16
      %1319 = vst.msk [vmem:[%s1318 + $0x1] sm:$0xff] %vm1296, %v1288
      %1320 = vst.msk [vmem:[%s1318 + $0x11] sm:$0xff] %vm1296, %v1289
      %1321 = vst.msk [vmem:[%s1318 + $0x21] sm:$0xff] %vm1296, %v1290
      %1322 = vst.msk [vmem:[%s1318 + $0x31] sm:$0xff] %vm1296, %v1291
      %1323 = vst.msk [vmem:[%s1318 + $0x41] sm:$0xff] %vm1296, %v1292
      %1324 = vst.msk [vmem:[%s1318 + $0x51] sm:$0xff] %vm1296, %v1293
      %1325 = vst.msk [vmem:[%s1318 + $0x61] sm:$0xff] %vm1296, %v1294
      %1326 = vst.msk [vmem:[%s1318 + $0x71] sm:$0xff] %vm1296, %v1295
      %v1327 = vld [vmem:[#allocation2] sm:$0xff]
      %v1328 = vld [vmem:[#allocation2 + $0x8] sm:$0x3]
      %v1329 = vld [vmem:[#allocation2 + $0x10] sm:$0xff]
      %v1330 = vld [vmem:[#allocation2 + $0x18] sm:$0x3]
      %v1331 = vld [vmem:[#allocation2 + $0x20] sm:$0xff]
      %v1332 = vld [vmem:[#allocation2 + $0x28] sm:$0x3]
      %v1333 = vld [vmem:[#allocation2 + $0x30] sm:$0xff]
      %v1334 = vld [vmem:[#allocation2 + $0x38] sm:$0x3]
      %v1335 = vld [vmem:[#allocation2 + $0x40] sm:$0xff]
      %v1336 = vld [vmem:[#allocation2 + $0x48] sm:$0x3]
      %v1337 = vld [vmem:[#allocation2 + $0x50] sm:$0xff]
      %v1338 = vld [vmem:[#allocation2 + $0x58] sm:$0x3]
      %v1339 = vld [vmem:[#allocation2 + $0x60] sm:$0xff]
      %v1340 = vld [vmem:[#allocation2 + $0x68] sm:$0x3]
      %v1341 = vld [vmem:[#allocation2 + $0x70] sm:$0xff]
      %v1342 = vld [vmem:[#allocation2 + $0x78] sm:$0x3]
      %v1343 = vld [vmem:[#allocation2 + $0x80] sm:$0xff]
      %v1344 = vld [vmem:[#allocation2 + $0x88] sm:$0x3]
      %v1345 = vld [vmem:[#allocation2 + $0x90] sm:$0xff]
      %v1346 = vld [vmem:[#allocation2 + $0x98] sm:$0x3]
      %v1347 = vpack.c.bf16 %v1329, %v1327
      %v1348 = vpack.c.bf16 %v1333, %v1331
      %v1349 = vpack.c.bf16 %v1337, %v1335
      %v1350 = vpack.c.bf16 %v1341, %v1339
      %v1351 = vld [vmem:[%s3] sm:$0xf]
      %v1368 = vrot.slane %v1327, 1
      %v1369 = vrot.slane %v1328, 1
      %v1370 = vsel %vm528, %v1368, %v1369
      %v1371 = vrot.slane %v1329, 1
      %v1372 = vrot.slane %v1330, 1
      %v1373 = vsel %vm528, %v1371, %v1372
      %v1374 = vrot.slane %v1331, 1
      %v1375 = vrot.slane %v1332, 1
      %v1376 = vsel %vm528, %v1374, %v1375
      %v1377 = vrot.slane %v1333, 1
      %v1378 = vrot.slane %v1334, 1
      %v1379 = vsel %vm528, %v1377, %v1378
      %v1380 = vrot.slane %v1335, 1
      %v1381 = vrot.slane %v1336, 1
      %v1382 = vsel %vm528, %v1380, %v1381
      %v1383 = vrot.slane %v1337, 1
      %v1384 = vrot.slane %v1338, 1
      %v1385 = vsel %vm528, %v1383, %v1384
      %v1386 = vrot.slane %v1339, 1
      %v1387 = vrot.slane %v1340, 1
      %v1388 = vsel %vm528, %v1386, %v1387
      %v1389 = vrot.slane %v1341, 1
      %v1390 = vrot.slane %v1342, 1
      %v1391 = vsel %vm528, %v1389, %v1390
      %v1400 = vpack.c.bf16 %v1373, %v1370
      %v1401 = vpack.c.bf16 %v1379, %v1376
      %v1402 = vpack.c.bf16 %v1385, %v1382
      %v1403 = vpack.c.bf16 %v1391, %v1388
      %s1404 = scalar_lea.vmem %s3, 4
      %v1405 = vld [vmem:[%s1404] sm:$0xf]
      %v1407 = vsel %vm1296, %v1400, 0
      %v1410 = vsel %vm1296, %v1401, 0
      %v1413 = vsel %vm1296, %v1402, 0
      %v1416 = vsel %vm1296, %v1403, 0
      %vm1418 = vcmask 1043456
      %v1420 = vsel %vm1418, %v1405, 0
      %1422 = vmatprep.subr.bf16.mxu0 0
      %1423 = vmatpush1.bf16.msra.mxu0 %v1420
      %1424 = vmatprep.subr.bf16.mxu0 0
      %1425 = vmatpush1.bf16.msra.mxu0 0
      %1426 = vmatprep.subr.bf16.mxu0 0
      %1427 = vmatpush1.bf16.msra.mxu0 0
      %1428 = vmatprep.subr.bf16.mxu0 0
      %1429 = vmatpush1.bf16.msra.mxu0 0
      %1430 = vmatprep.subr.bf16.mxu0 0
      %1431 = vmatpush1.bf16.msra.mxu0 0
      %1432 = vmatprep.subr.bf16.mxu0 0
      %1433 = vmatpush1.bf16.msra.mxu0 0
      %1434 = vmatprep.subr.bf16.mxu0 0
      %1435 = vmatpush1.bf16.msra.mxu0 0
      %1436 = vmatprep.subr.bf16.mxu0 0
      %1437 = vmatpush1.bf16.msra.mxu0 0
      %1438 = vmatprep.subr.bf16.mxu0 0
      %1439 = vmatpush1.bf16.msra.mxu0 0
      %1440 = vmatprep.subr.bf16.mxu0 0
      %1441 = vmatpush1.bf16.msra.mxu0 0
      %1442 = vmatprep.subr.bf16.mxu0 0
      %1443 = vmatpush1.bf16.msra.mxu0 0
      %1444 = vmatprep.subr.bf16.mxu0 0
      %1445 = vmatpush1.bf16.msra.mxu0 0
      %1446 = vmatprep.subr.bf16.mxu0 0
      %1447 = vmatpush1.bf16.msra.mxu0 0
      %1448 = vmatprep.subr.bf16.mxu0 0
      %1449 = vmatpush1.bf16.msra.mxu0 0
      %1450 = vmatprep.subr.bf16.mxu0 0
      %1451 = vmatpush1.bf16.msra.mxu0 0
      %1452 = vmatprep.subr.bf16.mxu0 0
      %1453 = vmatpush1.bf16.msra.mxu0 0
      %1454 = vmatprep.mubr.bf16.mxu0 0
      %1455 = vmatmul.mubr.bf16.gmra.mrb[0].mxu0 %v1407
      %v1456 = vpop.f32.mrb[0].mxu0
      %v1457 = vadd.f32 0.0, %v1456
      %v1458 = vpop.f32.mrb[0].mxu0
      %v1459 = vpop.f32.mrb[0].mxu0
      %v1460 = vadd.f32 0.0, %v1459
      %v1461 = vpop.f32.mrb[0].mxu0
      %1462 = vmatprep.mubr.bf16.mxu0 0
      %1463 = vmatmul.mubr.bf16.gmra.mrb[0].mxu0 %v1410
      %v1464 = vpop.f32.mrb[0].mxu0
      %v1465 = vadd.f32 0.0, %v1464
      %v1466 = vpop.f32.mrb[0].mxu0
      %v1467 = vpop.f32.mrb[0].mxu0
      %v1468 = vadd.f32 0.0, %v1467
      %v1469 = vpop.f32.mrb[0].mxu0
      %1470 = vmatprep.mubr.bf16.mxu0 0
      %1471 = vmatmul.mubr.bf16.gmra.mrb[0].mxu0 %v1413
      %v1472 = vpop.f32.mrb[0].mxu0
      %v1473 = vadd.f32 0.0, %v1472
      %v1474 = vpop.f32.mrb[0].mxu0
      %v1475 = vpop.f32.mrb[0].mxu0
      %v1476 = vadd.f32 0.0, %v1475
      %v1477 = vpop.f32.mrb[0].mxu0
      %1478 = vmatprep.mubr.bf16.mxu0 0
      %1479 = vmatmul.mubr.bf16.gmra.mrb[0].mxu0 %v1416
      %v1480 = vpop.f32.mrb[0].mxu0
      %v1481 = vadd.f32 0.0, %v1480
      %v1482 = vpop.f32.mrb[0].mxu0
      %v1483 = vpop.f32.mrb[0].mxu0
      %v1484 = vadd.f32 0.0, %v1483
      %v1485 = vpop.f32.mrb[0].mxu0
      %1486 = vdwg.mxu0
      %v1488 = vsel %vm1296, %v1347, 0
      %v1491 = vsel %vm1296, %v1348, 0
      %v1494 = vsel %vm1296, %v1349, 0
      %v1497 = vsel %vm1296, %v1350, 0
      %v1500 = vsel %vm1418, %v1351, 0
      %1502 = vmatprep.subr.bf16.mxu0 0
      %1503 = vmatpush1.bf16.msra.mxu0 %v1500
      %1504 = vmatprep.subr.bf16.mxu0 0
      %1505 = vmatpush1.bf16.msra.mxu0 0
      %1506 = vmatprep.subr.bf16.mxu0 0
      %1507 = vmatpush1.bf16.msra.mxu0 0
      %1508 = vmatprep.subr.bf16.mxu0 0
      %1509 = vmatpush1.bf16.msra.mxu0 0
      %1510 = vmatprep.subr.bf16.mxu0 0
      %1511 = vmatpush1.bf16.msra.mxu0 0
      %1512 = vmatprep.subr.bf16.mxu0 0
      %1513 = vmatpush1.bf16.msra.mxu0 0
      %1514 = vmatprep.subr.bf16.mxu0 0
      %1515 = vmatpush1.bf16.msra.mxu0 0
      %1516 = vmatprep.subr.bf16.mxu0 0
      %1517 = vmatpush1.bf16.msra.mxu0 0
      %1518 = vmatprep.subr.bf16.mxu0 0
      %1519 = vmatpush1.bf16.msra.mxu0 0
      %1520 = vmatprep.subr.bf16.mxu0 0
      %1521 = vmatpush1.bf16.msra.mxu0 0
      %1522 = vmatprep.subr.bf16.mxu0 0
      %1523 = vmatpush1.bf16.msra.mxu0 0
      %1524 = vmatprep.subr.bf16.mxu0 0
      %1525 = vmatpush1.bf16.msra.mxu0 0
      %1526 = vmatprep.subr.bf16.mxu0 0
      %1527 = vmatpush1.bf16.msra.mxu0 0
      %1528 = vmatprep.subr.bf16.mxu0 0
      %1529 = vmatpush1.bf16.msra.mxu0 0
      %1530 = vmatprep.subr.bf16.mxu0 0
      %1531 = vmatpush1.bf16.msra.mxu0 0
      %1532 = vmatprep.subr.bf16.mxu0 0
      %1533 = vmatpush1.bf16.msra.mxu0 0
      %1534 = vmatprep.mubr.bf16.mxu0 0
      %1535 = vmatmul.mubr.bf16.gmra.mrb[0].mxu0 %v1488
      %v1536 = vpop.f32.mrb[0].mxu0
      %v1537 = vadd.f32 %v1457, %v1536
      %v1538 = vpop.f32.mrb[0].mxu0
      %v1539 = vpop.f32.mrb[0].mxu0
      %v1540 = vadd.f32 %v1460, %v1539
      %v1541 = vpop.f32.mrb[0].mxu0
      %1542 = vmatprep.mubr.bf16.mxu0 0
      %1543 = vmatmul.mubr.bf16.gmra.mrb[0].mxu0 %v1491
      %v1544 = vpop.f32.mrb[0].mxu0
      %v1545 = vadd.f32 %v1465, %v1544
      %v1546 = vpop.f32.mrb[0].mxu0
      %v1547 = vpop.f32.mrb[0].mxu0
      %v1548 = vadd.f32 %v1468, %v1547
      %v1549 = vpop.f32.mrb[0].mxu0
      %1550 = vmatprep.mubr.bf16.mxu0 0
      %1551 = vmatmul.mubr.bf16.gmra.mrb[0].mxu0 %v1494
      %v1552 = vpop.f32.mrb[0].mxu0
      %v1553 = vadd.f32 %v1473, %v1552
      %v1554 = vpop.f32.mrb[0].mxu0
      %v1555 = vpop.f32.mrb[0].mxu0
      %v1556 = vadd.f32 %v1476, %v1555
      %v1557 = vpop.f32.mrb[0].mxu0
      %1558 = vmatprep.mubr.bf16.mxu0 0
      %1559 = vmatmul.mubr.bf16.gmra.mrb[0].mxu0 %v1497
      %v1560 = vpop.f32.mrb[0].mxu0
      %v1561 = vadd.f32 %v1481, %v1560
      %v1562 = vpop.f32.mrb[0].mxu0
      %v1563 = vpop.f32.mrb[0].mxu0
      %v1564 = vadd.f32 %v1484, %v1563
      %v1565 = vpop.f32.mrb[0].mxu0
      %1566 = vdwg.mxu0
      %vm1567 = vcmask 1045504
      %v1568 = vrot.slane %v1327, 2
      %v1569 = vrot.slane %v1328, 2
      %v1570 = vsel %vm1567, %v1568, %v1569
      %v1571 = vrot.slane %v1329, 2
      %v1572 = vrot.slane %v1330, 2
      %v1573 = vsel %vm1567, %v1571, %v1572
      %v1574 = vrot.slane %v1331, 2
      %v1575 = vrot.slane %v1332, 2
      %v1576 = vsel %vm1567, %v1574, %v1575
      %v1577 = vrot.slane %v1333, 2
      %v1578 = vrot.slane %v1334, 2
      %v1579 = vsel %vm1567, %v1577, %v1578
      %v1580 = vrot.slane %v1335, 2
      %v1581 = vrot.slane %v1336, 2
      %v1582 = vsel %vm1567, %v1580, %v1581
      %v1583 = vrot.slane %v1337, 2
      %v1584 = vrot.slane %v1338, 2
      %v1585 = vsel %vm1567, %v1583, %v1584
      %v1586 = vrot.slane %v1339, 2
      %v1587 = vrot.slane %v1340, 2
      %v1588 = vsel %vm1567, %v1586, %v1587
      %v1589 = vrot.slane %v1341, 2
      %v1590 = vrot.slane %v1342, 2
      %v1591 = vsel %vm1567, %v1589, %v1590
      %v1600 = vpack.c.bf16 %v1573, %v1570
      %v1601 = vpack.c.bf16 %v1579, %v1576
      %v1602 = vpack.c.bf16 %v1585, %v1582
      %v1603 = vpack.c.bf16 %v1591, %v1588
      %s1604 = scalar_lea.vmem %s3, 8
      %v1605 = vld [vmem:[%s1604] sm:$0xf]
      %v1607 = vsel %vm1296, %v1600, 0
      %v1610 = vsel %vm1296, %v1601, 0
      %v1613 = vsel %vm1296, %v1602, 0
      %v1616 = vsel %vm1296, %v1603, 0
      %v1619 = vsel %vm1418, %v1605, 0
      %1621 = vmatprep.subr.bf16.mxu0 0
      %1622 = vmatpush1.bf16.msra.mxu0 %v1619
      %1623 = vmatprep.subr.bf16.mxu0 0
      %1624 = vmatpush1.bf16.msra.mxu0 0
      %1625 = vmatprep.subr.bf16.mxu0 0
      %1626 = vmatpush1.bf16.msra.mxu0 0
      %1627 = vmatprep.subr.bf16.mxu0 0
      %1628 = vmatpush1.bf16.msra.mxu0 0
      %1629 = vmatprep.subr.bf16.mxu0 0
      %1630 = vmatpush1.bf16.msra.mxu0 0
      %1631 = vmatprep.subr.bf16.mxu0 0
      %1632 = vmatpush1.bf16.msra.mxu0 0
      %1633 = vmatprep.subr.bf16.mxu0 0
      %1634 = vmatpush1.bf16.msra.mxu0 0
      %1635 = vmatprep.subr.bf16.mxu0 0
      %1636 = vmatpush1.bf16.msra.mxu0 0
      %1637 = vmatprep.subr.bf16.mxu0 0
      %1638 = vmatpush1.bf16.msra.mxu0 0
      %1639 = vmatprep.subr.bf16.mxu0 0
      %1640 = vmatpush1.bf16.msra.mxu0 0
      %1641 = vmatprep.subr.bf16.mxu0 0
      %1642 = vmatpush1.bf16.msra.mxu0 0
      %1643 = vmatprep.subr.bf16.mxu0 0
      %1644 = vmatpush1.bf16.msra.mxu0 0
      %1645 = vmatprep.subr.bf16.mxu0 0
      %1646 = vmatpush1.bf16.msra.mxu0 0
      %1647 = vmatprep.subr.bf16.mxu0 0
      %1648 = vmatpush1.bf16.msra.mxu0 0
      %1649 = vmatprep.subr.bf16.mxu0 0
      %1650 = vmatpush1.bf16.msra.mxu0 0
      %1651 = vmatprep.subr.bf16.mxu0 0
      %1652 = vmatpush1.bf16.msra.mxu0 0
      %1653 = vmatprep.mubr.bf16.mxu0 0
      %1654 = vmatmul.mubr.bf16.gmra.mrb[0].mxu0 %v1607
      %v1655 = vpop.f32.mrb[0].mxu0
      %v1656 = vadd.f32 0.0, %v1655
      %v1657 = vpop.f32.mrb[0].mxu0
      %v1658 = vpop.f32.mrb[0].mxu0
      %v1659 = vadd.f32 0.0, %v1658
      %v1660 = vpop.f32.mrb[0].mxu0
      %1661 = vmatprep.mubr.bf16.mxu0 0
      %1662 = vmatmul.mubr.bf16.gmra.mrb[0].mxu0 %v1610
      %v1663 = vpop.f32.mrb[0].mxu0
      %v1664 = vadd.f32 0.0, %v1663
      %v1665 = vpop.f32.mrb[0].mxu0
      %v1666 = vpop.f32.mrb[0].mxu0
      %v1667 = vadd.f32 0.0, %v1666
      %v1668 = vpop.f32.mrb[0].mxu0
      %1669 = vmatprep.mubr.bf16.mxu0 0
      %1670 = vmatmul.mubr.bf16.gmra.mrb[0].mxu0 %v1613
      %v1671 = vpop.f32.mrb[0].mxu0
      %v1672 = vadd.f32 0.0, %v1671
      %v1673 = vpop.f32.mrb[0].mxu0
      %v1674 = vpop.f32.mrb[0].mxu0
      %v1675 = vadd.f32 0.0, %v1674
      %v1676 = vpop.f32.mrb[0].mxu0
      %1677 = vmatprep.mubr.bf16.mxu0 0
      %1678 = vmatmul.mubr.bf16.gmra.mrb[0].mxu0 %v1616
      %v1679 = vpop.f32.mrb[0].mxu0
      %v1680 = vadd.f32 0.0, %v1679
      %v1681 = vpop.f32.mrb[0].mxu0
      %v1682 = vpop.f32.mrb[0].mxu0
      %v1683 = vadd.f32 0.0, %v1682
      %v1684 = vpop.f32.mrb[0].mxu0
      %1685 = vdwg.mxu0
      %v1686 = vadd.f32 %v1537, %v1656
      %v1687 = vadd.f32 %v1540, %v1659
      %v1688 = vadd.f32 %v1545, %v1664
      %v1689 = vadd.f32 %v1548, %v1667
      %v1690 = vadd.f32 %v1553, %v1672
      %v1691 = vadd.f32 %v1556, %v1675
      %v1692 = vadd.f32 %v1561, %v1680
      %v1693 = vadd.f32 %v1564, %v1683
      %v1694 = vpack.c.bf16 %v1331, %v1329
      %v1695 = vpack.c.bf16 %v1335, %v1333
      %v1696 = vpack.c.bf16 %v1339, %v1337
      %v1697 = vpack.c.bf16 %v1343, %v1341
      %s1698 = scalar_lea.vmem %s3, 12
      %v1699 = vld [vmem:[%s1698] sm:$0xf]
      %v1701 = vsel %vm1296, %v1694, 0
      %v1704 = vsel %vm1296, %v1695, 0
      %v1707 = vsel %vm1296, %v1696, 0
      %v1710 = vsel %vm1296, %v1697, 0
      %v1713 = vsel %vm1418, %v1699, 0
      %1715 = vmatprep.subr.bf16.mxu0 0
      %1716 = vmatpush1.bf16.msra.mxu0 %v1713
      %1717 = vmatprep.subr.bf16.mxu0 0
      %1718 = vmatpush1.bf16.msra.mxu0 0
      %1719 = vmatprep.subr.bf16.mxu0 0
      %1720 = vmatpush1.bf16.msra.mxu0 0
      %1721 = vmatprep.subr.bf16.mxu0 0
      %1722 = vmatpush1.bf16.msra.mxu0 0
      %1723 = vmatprep.subr.bf16.mxu0 0
      %1724 = vmatpush1.bf16.msra.mxu0 0
      %1725 = vmatprep.subr.bf16.mxu0 0
      %1726 = vmatpush1.bf16.msra.mxu0 0
      %1727 = vmatprep.subr.bf16.mxu0 0
      %1728 = vmatpush1.bf16.msra.mxu0 0
      %1729 = vmatprep.subr.bf16.mxu0 0
      %1730 = vmatpush1.bf16.msra.mxu0 0
      %1731 = vmatprep.subr.bf16.mxu0 0
      %1732 = vmatpush1.bf16.msra.mxu0 0
      %1733 = vmatprep.subr.bf16.mxu0 0
      %1734 = vmatpush1.bf16.msra.mxu0 0
      %1735 = vmatprep.subr.bf16.mxu0 0
      %1736 = vmatpush1.bf16.msra.mxu0 0
      %1737 = vmatprep.subr.bf16.mxu0 0
      %1738 = vmatpush1.bf16.msra.mxu0 0
      %1739 = vmatprep.subr.bf16.mxu0 0
      %1740 = vmatpush1.bf16.msra.mxu0 0
      %1741 = vmatprep.subr.bf16.mxu0 0
      %1742 = vmatpush1.bf16.msra.mxu0 0
      %1743 = vmatprep.subr.bf16.mxu0 0
      %1744 = vmatpush1.bf16.msra.mxu0 0
      %1745 = vmatprep.subr.bf16.mxu0 0
      %1746 = vmatpush1.bf16.msra.mxu0 0
      %1747 = vmatprep.mubr.bf16.mxu0 0
      %1748 = vmatmul.mubr.bf16.gmra.mrb[0].mxu0 %v1701
      %v1749 = vpop.f32.mrb[0].mxu0
      %v1750 = vadd.f32 0.0, %v1749
      %v1751 = vpop.f32.mrb[0].mxu0
      %v1752 = vpop.f32.mrb[0].mxu0
      %v1753 = vadd.f32 0.0, %v1752
      %v1754 = vpop.f32.mrb[0].mxu0
      %1755 = vmatprep.mubr.bf16.mxu0 0
      %1756 = vmatmul.mubr.bf16.gmra.mrb[0].mxu0 %v1704
      %v1757 = vpop.f32.mrb[0].mxu0
      %v1758 = vadd.f32 0.0, %v1757
      %v1759 = vpop.f32.mrb[0].mxu0
      %v1760 = vpop.f32.mrb[0].mxu0
      %v1761 = vadd.f32 0.0, %v1760
      %v1762 = vpop.f32.mrb[0].mxu0
      %1763 = vmatprep.mubr.bf16.mxu0 0
      %1764 = vmatmul.mubr.bf16.gmra.mrb[0].mxu0 %v1707
      %v1765 = vpop.f32.mrb[0].mxu0
      %v1766 = vadd.f32 0.0, %v1765
      %v1767 = vpop.f32.mrb[0].mxu0
      %v1768 = vpop.f32.mrb[0].mxu0
      %v1769 = vadd.f32 0.0, %v1768
      %v1770 = vpop.f32.mrb[0].mxu0
      %1771 = vmatprep.mubr.bf16.mxu0 0
      %1772 = vmatmul.mubr.bf16.gmra.mrb[0].mxu0 %v1710
      %v1773 = vpop.f32.mrb[0].mxu0
      %v1774 = vadd.f32 0.0, %v1773
      %v1775 = vpop.f32.mrb[0].mxu0
      %v1776 = vpop.f32.mrb[0].mxu0
      %v1777 = vadd.f32 0.0, %v1776
      %v1778 = vpop.f32.mrb[0].mxu0
      %1779 = vdwg.mxu0
      %v1780 = vadd.f32 %v1686, %v1750
      %v1781 = vadd.f32 %v1687, %v1753
      %v1782 = vadd.f32 %v1688, %v1758
      %v1783 = vadd.f32 %v1689, %v1761
      %v1784 = vadd.f32 %v1690, %v1766
      %v1785 = vadd.f32 %v1691, %v1769
      %v1786 = vadd.f32 %v1692, %v1774
      %v1787 = vadd.f32 %v1693, %v1777
      %v1790 = vrot.slane %v1343, 1
      %v1791 = vrot.slane %v1344, 1
      %v1792 = vsel %vm528, %v1790, %v1791
      %v1794 = vpack.c.bf16 %v1376, %v1373
      %v1795 = vpack.c.bf16 %v1382, %v1379
      %v1796 = vpack.c.bf16 %v1388, %v1385
      %v1797 = vpack.c.bf16 %v1792, %v1391
      %s1798 = scalar_lea.vmem %s3, 16
      %v1799 = vld [vmem:[%s1798] sm:$0xf]
      %v1801 = vsel %vm1296, %v1794, 0
      %v1804 = vsel %vm1296, %v1795, 0
      %v1807 = vsel %vm1296, %v1796, 0
      %v1810 = vsel %vm1296, %v1797, 0
      %v1813 = vsel %vm1418, %v1799, 0
      %1815 = vmatprep.subr.bf16.mxu0 0
      %1816 = vmatpush1.bf16.msra.mxu0 %v1813
      %1817 = vmatprep.subr.bf16.mxu0 0
      %1818 = vmatpush1.bf16.msra.mxu0 0
      %1819 = vmatprep.subr.bf16.mxu0 0
      %1820 = vmatpush1.bf16.msra.mxu0 0
      %1821 = vmatprep.subr.bf16.mxu0 0
      %1822 = vmatpush1.bf16.msra.mxu0 0
      %1823 = vmatprep.subr.bf16.mxu0 0
      %1824 = vmatpush1.bf16.msra.mxu0 0
      %1825 = vmatprep.subr.bf16.mxu0 0
      %1826 = vmatpush1.bf16.msra.mxu0 0
      %1827 = vmatprep.subr.bf16.mxu0 0
      %1828 = vmatpush1.bf16.msra.mxu0 0
      %1829 = vmatprep.subr.bf16.mxu0 0
      %1830 = vmatpush1.bf16.msra.mxu0 0
      %1831 = vmatprep.subr.bf16.mxu0 0
      %1832 = vmatpush1.bf16.msra.mxu0 0
      %1833 = vmatprep.subr.bf16.mxu0 0
      %1834 = vmatpush1.bf16.msra.mxu0 0
      %1835 = vmatprep.subr.bf16.mxu0 0
      %1836 = vmatpush1.bf16.msra.mxu0 0
      %1837 = vmatprep.subr.bf16.mxu0 0
      %1838 = vmatpush1.bf16.msra.mxu0 0
      %1839 = vmatprep.subr.bf16.mxu0 0
      %1840 = vmatpush1.bf16.msra.mxu0 0
      %1841 = vmatprep.subr.bf16.mxu0 0
      %1842 = vmatpush1.bf16.msra.mxu0 0
      %1843 = vmatprep.subr.bf16.mxu0 0
      %1844 = vmatpush1.bf16.msra.mxu0 0
      %1845 = vmatprep.subr.bf16.mxu0 0
      %1846 = vmatpush1.bf16.msra.mxu0 0
      %1847 = vmatprep.mubr.bf16.mxu0 0
      %1848 = vmatmul.mubr.bf16.gmra.mrb[0].mxu0 %v1801
      %v1849 = vpop.f32.mrb[0].mxu0
      %v1850 = vadd.f32 0.0, %v1849
      %v1851 = vpop.f32.mrb[0].mxu0
      %v1852 = vpop.f32.mrb[0].mxu0
      %v1853 = vadd.f32 0.0, %v1852
      %v1854 = vpop.f32.mrb[0].mxu0
      %1855 = vmatprep.mubr.bf16.mxu0 0
      %1856 = vmatmul.mubr.bf16.gmra.mrb[0].mxu0 %v1804
      %v1857 = vpop.f32.mrb[0].mxu0
      %v1858 = vadd.f32 0.0, %v1857
      %v1859 = vpop.f32.mrb[0].mxu0
      %v1860 = vpop.f32.mrb[0].mxu0
      %v1861 = vadd.f32 0.0, %v1860
      %v1862 = vpop.f32.mrb[0].mxu0
      %1863 = vmatprep.mubr.bf16.mxu0 0
      %1864 = vmatmul.mubr.bf16.gmra.mrb[0].mxu0 %v1807
      %v1865 = vpop.f32.mrb[0].mxu0
      %v1866 = vadd.f32 0.0, %v1865
      %v1867 = vpop.f32.mrb[0].mxu0
      %v1868 = vpop.f32.mrb[0].mxu0
      %v1869 = vadd.f32 0.0, %v1868
      %v1870 = vpop.f32.mrb[0].mxu0
      %1871 = vmatprep.mubr.bf16.mxu0 0
      %1872 = vmatmul.mubr.bf16.gmra.mrb[0].mxu0 %v1810
      %v1873 = vpop.f32.mrb[0].mxu0
      %v1874 = vadd.f32 0.0, %v1873
      %v1875 = vpop.f32.mrb[0].mxu0
      %v1876 = vpop.f32.mrb[0].mxu0
      %v1877 = vadd.f32 0.0, %v1876
      %v1878 = vpop.f32.mrb[0].mxu0
      %1879 = vdwg.mxu0
      %v1880 = vadd.f32 %v1780, %v1850
      %v1881 = vadd.f32 %v1781, %v1853
      %v1882 = vadd.f32 %v1782, %v1858
      %v1883 = vadd.f32 %v1783, %v1861
      %v1884 = vadd.f32 %v1784, %v1866
      %v1885 = vadd.f32 %v1785, %v1869
      %v1886 = vadd.f32 %v1786, %v1874
      %v1887 = vadd.f32 %v1787, %v1877
      %v1888 = vrot.slane %v1343, 2
      %v1889 = vrot.slane %v1344, 2
      %v1890 = vsel %vm1567, %v1888, %v1889
      %v1892 = vpack.c.bf16 %v1576, %v1573
      %v1893 = vpack.c.bf16 %v1582, %v1579
      %v1894 = vpack.c.bf16 %v1588, %v1585
      %v1895 = vpack.c.bf16 %v1890, %v1591
      %s1896 = scalar_lea.vmem %s3, 20
      %v1897 = vld [vmem:[%s1896] sm:$0xf]
      %v1899 = vsel %vm1296, %v1892, 0
      %v1902 = vsel %vm1296, %v1893, 0
      %v1905 = vsel %vm1296, %v1894, 0
      %v1908 = vsel %vm1296, %v1895, 0
      %v1911 = vsel %vm1418, %v1897, 0
      %1913 = vmatprep.subr.bf16.mxu0 0
      %1914 = vmatpush1.bf16.msra.mxu0 %v1911
      %1915 = vmatprep.subr.bf16.mxu0 0
      %1916 = vmatpush1.bf16.msra.mxu0 0
      %1917 = vmatprep.subr.bf16.mxu0 0
      %1918 = vmatpush1.bf16.msra.mxu0 0
      %1919 = vmatprep.subr.bf16.mxu0 0
      %1920 = vmatpush1.bf16.msra.mxu0 0
      %1921 = vmatprep.subr.bf16.mxu0 0
      %1922 = vmatpush1.bf16.msra.mxu0 0
      %1923 = vmatprep.subr.bf16.mxu0 0
      %1924 = vmatpush1.bf16.msra.mxu0 0
      %1925 = vmatprep.subr.bf16.mxu0 0
      %1926 = vmatpush1.bf16.msra.mxu0 0
      %1927 = vmatprep.subr.bf16.mxu0 0
      %1928 = vmatpush1.bf16.msra.mxu0 0
      %1929 = vmatprep.subr.bf16.mxu0 0
      %1930 = vmatpush1.bf16.msra.mxu0 0
      %1931 = vmatprep.subr.bf16.mxu0 0
      %1932 = vmatpush1.bf16.msra.mxu0 0
      %1933 = vmatprep.subr.bf16.mxu0 0
      %1934 = vmatpush1.bf16.msra.mxu0 0
      %1935 = vmatprep.subr.bf16.mxu0 0
      %1936 = vmatpush1.bf16.msra.mxu0 0
      %1937 = vmatprep.subr.bf16.mxu0 0
      %1938 = vmatpush1.bf16.msra.mxu0 0
      %1939 = vmatprep.subr.bf16.mxu0 0
      %1940 = vmatpush1.bf16.msra.mxu0 0
      %1941 = vmatprep.subr.bf16.mxu0 0
      %1942 = vmatpush1.bf16.msra.mxu0 0
      %1943 = vmatprep.subr.bf16.mxu0 0
      %1944 = vmatpush1.bf16.msra.mxu0 0
      %1945 = vmatprep.mubr.bf16.mxu0 0
      %1946 = vmatmul.mubr.bf16.gmra.mrb[0].mxu0 %v1899
      %v1947 = vpop.f32.mrb[0].mxu0
      %v1948 = vadd.f32 0.0, %v1947
      %v1949 = vpop.f32.mrb[0].mxu0
      %v1950 = vpop.f32.mrb[0].mxu0
      %v1951 = vadd.f32 0.0, %v1950
      %v1952 = vpop.f32.mrb[0].mxu0
      %1953 = vmatprep.mubr.bf16.mxu0 0
      %1954 = vmatmul.mubr.bf16.gmra.mrb[0].mxu0 %v1902
      %v1955 = vpop.f32.mrb[0].mxu0
      %v1956 = vadd.f32 0.0, %v1955
      %v1957 = vpop.f32.mrb[0].mxu0
      %v1958 = vpop.f32.mrb[0].mxu0
      %v1959 = vadd.f32 0.0, %v1958
      %v1960 = vpop.f32.mrb[0].mxu0
      %1961 = vmatprep.mubr.bf16.mxu0 0
      %1962 = vmatmul.mubr.bf16.gmra.mrb[0].mxu0 %v1905
      %v1963 = vpop.f32.mrb[0].mxu0
      %v1964 = vadd.f32 0.0, %v1963
      %v1965 = vpop.f32.mrb[0].mxu0
      %v1966 = vpop.f32.mrb[0].mxu0
      %v1967 = vadd.f32 0.0, %v1966
      %v1968 = vpop.f32.mrb[0].mxu0
      %1969 = vmatprep.mubr.bf16.mxu0 0
      %1970 = vmatmul.mubr.bf16.gmra.mrb[0].mxu0 %v1908
      %v1971 = vpop.f32.mrb[0].mxu0
      %v1972 = vadd.f32 0.0, %v1971
      %v1973 = vpop.f32.mrb[0].mxu0
      %v1974 = vpop.f32.mrb[0].mxu0
      %v1975 = vadd.f32 0.0, %v1974
      %v1976 = vpop.f32.mrb[0].mxu0
      %1977 = vdwg.mxu0
      %v1978 = vadd.f32 %v1880, %v1948
      %v1979 = vadd.f32 %v1881, %v1951
      %v1980 = vadd.f32 %v1882, %v1956
      %v1981 = vadd.f32 %v1883, %v1959
      %v1982 = vadd.f32 %v1884, %v1964
      %v1983 = vadd.f32 %v1885, %v1967
      %v1984 = vadd.f32 %v1886, %v1972
      %v1985 = vadd.f32 %v1887, %v1975
      %v1986 = vpack.c.bf16 %v1345, %v1343
      %s1987 = scalar_lea.vmem %s3, 24
      %v1988 = vld [vmem:[%s1987] sm:$0xf]
      %v1990 = vsel %vm1296, %v1986, 0
      %v1993 = vsel %vm1418, %v1988, 0
      %1995 = vmatprep.subr.bf16.mxu0 0
      %1996 = vmatpush1.bf16.msra.mxu0 %v1993
      %1997 = vmatprep.subr.bf16.mxu0 0
      %1998 = vmatpush1.bf16.msra.mxu0 0
      %1999 = vmatprep.subr.bf16.mxu0 0
      %2000 = vmatpush1.bf16.msra.mxu0 0
      %2001 = vmatprep.subr.bf16.mxu0 0
      %2002 = vmatpush1.bf16.msra.mxu0 0
      %2003 = vmatprep.subr.bf16.mxu0 0
      %2004 = vmatpush1.bf16.msra.mxu0 0
      %2005 = vmatprep.subr.bf16.mxu0 0
      %2006 = vmatpush1.bf16.msra.mxu0 0
      %2007 = vmatprep.subr.bf16.mxu0 0
      %2008 = vmatpush1.bf16.msra.mxu0 0
      %2009 = vmatprep.subr.bf16.mxu0 0
      %2010 = vmatpush1.bf16.msra.mxu0 0
      %2011 = vmatprep.subr.bf16.mxu0 0
      %2012 = vmatpush1.bf16.msra.mxu0 0
      %2013 = vmatprep.subr.bf16.mxu0 0
      %2014 = vmatpush1.bf16.msra.mxu0 0
      %2015 = vmatprep.subr.bf16.mxu0 0
      %2016 = vmatpush1.bf16.msra.mxu0 0
      %2017 = vmatprep.subr.bf16.mxu0 0
      %2018 = vmatpush1.bf16.msra.mxu0 0
      %2019 = vmatprep.subr.bf16.mxu0 0
      %2020 = vmatpush1.bf16.msra.mxu0 0
      %2021 = vmatprep.subr.bf16.mxu0 0
      %2022 = vmatpush1.bf16.msra.mxu0 0
      %2023 = vmatprep.subr.bf16.mxu0 0
      %2024 = vmatpush1.bf16.msra.mxu0 0
      %2025 = vmatprep.subr.bf16.mxu0 0
      %2026 = vmatpush1.bf16.msra.mxu0 0
      %2027 = vmatprep.mubr.bf16.mxu0 0
      %2028 = vmatmul.mubr.bf16.gmra.mrb[0].mxu0 %v1491
      %v2029 = vpop.f32.mrb[0].mxu0
      %v2030 = vadd.f32 0.0, %v2029
      %v2031 = vpop.f32.mrb[0].mxu0
      %v2032 = vpop.f32.mrb[0].mxu0
      %v2033 = vadd.f32 0.0, %v2032
      %v2034 = vpop.f32.mrb[0].mxu0
      %2035 = vmatprep.mubr.bf16.mxu0 0
      %2036 = vmatmul.mubr.bf16.gmra.mrb[0].mxu0 %v1494
      %v2037 = vpop.f32.mrb[0].mxu0
      %v2038 = vadd.f32 0.0, %v2037
      %v2039 = vpop.f32.mrb[0].mxu0
      %v2040 = vpop.f32.mrb[0].mxu0
      %v2041 = vadd.f32 0.0, %v2040
      %v2042 = vpop.f32.mrb[0].mxu0
      %2043 = vmatprep.mubr.bf16.mxu0 0
      %2044 = vmatmul.mubr.bf16.gmra.mrb[0].mxu0 %v1497
      %v2045 = vpop.f32.mrb[0].mxu0
      %v2046 = vadd.f32 0.0, %v2045
      %v2047 = vpop.f32.mrb[0].mxu0
      %v2048 = vpop.f32.mrb[0].mxu0
      %v2049 = vadd.f32 0.0, %v2048
      %v2050 = vpop.f32.mrb[0].mxu0
      %2051 = vmatprep.mubr.bf16.mxu0 0
      %2052 = vmatmul.mubr.bf16.gmra.mrb[0].mxu0 %v1990
      %v2053 = vpop.f32.mrb[0].mxu0
      %v2054 = vadd.f32 0.0, %v2053
      %v2055 = vpop.f32.mrb[0].mxu0
      %v2056 = vpop.f32.mrb[0].mxu0
      %v2057 = vadd.f32 0.0, %v2056
      %v2058 = vpop.f32.mrb[0].mxu0
      %2059 = vdwg.mxu0
      %v2060 = vadd.f32 %v1978, %v2030
      %v2061 = vadd.f32 %v1979, %v2033
      %v2062 = vadd.f32 %v1980, %v2038
      %v2063 = vadd.f32 %v1981, %v2041
      %v2064 = vadd.f32 %v1982, %v2046
      %v2065 = vadd.f32 %v1983, %v2049
      %v2066 = vadd.f32 %v1984, %v2054
      %v2067 = vadd.f32 %v1985, %v2057
      %v2070 = vrot.slane %v1345, 1
      %v2071 = vrot.slane %v1346, 1
      %v2072 = vsel %vm528, %v2070, %v2071
      %v2074 = vpack.c.bf16 %v2072, %v1792
      %s2075 = scalar_lea.vmem %s3, 28
      %v2076 = vld [vmem:[%s2075] sm:$0xf]
      %v2078 = vsel %vm1296, %v2074, 0
      %v2081 = vsel %vm1418, %v2076, 0
      %2083 = vmatprep.subr.bf16.mxu0 0
      %2084 = vmatpush1.bf16.msra.mxu0 %v2081
      %2085 = vmatprep.subr.bf16.mxu0 0
      %2086 = vmatpush1.bf16.msra.mxu0 0
      %2087 = vmatprep.subr.bf16.mxu0 0
      %2088 = vmatpush1.bf16.msra.mxu0 0
      %2089 = vmatprep.subr.bf16.mxu0 0
      %2090 = vmatpush1.bf16.msra.mxu0 0
      %2091 = vmatprep.subr.bf16.mxu0 0
      %2092 = vmatpush1.bf16.msra.mxu0 0
      %2093 = vmatprep.subr.bf16.mxu0 0
      %2094 = vmatpush1.bf16.msra.mxu0 0
      %2095 = vmatprep.subr.bf16.mxu0 0
      %2096 = vmatpush1.bf16.msra.mxu0 0
      %2097 = vmatprep.subr.bf16.mxu0 0
      %2098 = vmatpush1.bf16.msra.mxu0 0
      %2099 = vmatprep.subr.bf16.mxu0 0
      %2100 = vmatpush1.bf16.msra.mxu0 0
      %2101 = vmatprep.subr.bf16.mxu0 0
      %2102 = vmatpush1.bf16.msra.mxu0 0
      %2103 = vmatprep.subr.bf16.mxu0 0
      %2104 = vmatpush1.bf16.msra.mxu0 0
      %2105 = vmatprep.subr.bf16.mxu0 0
      %2106 = vmatpush1.bf16.msra.mxu0 0
      %2107 = vmatprep.subr.bf16.mxu0 0
      %2108 = vmatpush1.bf16.msra.mxu0 0
      %2109 = vmatprep.subr.bf16.mxu0 0
      %2110 = vmatpush1.bf16.msra.mxu0 0
      %2111 = vmatprep.subr.bf16.mxu0 0
      %2112 = vmatpush1.bf16.msra.mxu0 0
      %2113 = vmatprep.subr.bf16.mxu0 0
      %2114 = vmatpush1.bf16.msra.mxu0 0
      %2115 = vmatprep.mubr.bf16.mxu0 0
      %2116 = vmatmul.mubr.bf16.gmra.mrb[0].mxu0 %v1410
      %v2117 = vpop.f32.mrb[0].mxu0
      %v2118 = vadd.f32 0.0, %v2117
      %v2119 = vpop.f32.mrb[0].mxu0
      %v2120 = vpop.f32.mrb[0].mxu0
      %v2121 = vadd.f32 0.0, %v2120
      %v2122 = vpop.f32.mrb[0].mxu0
      %2123 = vmatprep.mubr.bf16.mxu0 0
      %2124 = vmatmul.mubr.bf16.gmra.mrb[0].mxu0 %v1413
      %v2125 = vpop.f32.mrb[0].mxu0
      %v2126 = vadd.f32 0.0, %v2125
      %v2127 = vpop.f32.mrb[0].mxu0
      %v2128 = vpop.f32.mrb[0].mxu0
      %v2129 = vadd.f32 0.0, %v2128
      %v2130 = vpop.f32.mrb[0].mxu0
      %2131 = vmatprep.mubr.bf16.mxu0 0
      %2132 = vmatmul.mubr.bf16.gmra.mrb[0].mxu0 %v1416
      %v2133 = vpop.f32.mrb[0].mxu0
      %v2134 = vadd.f32 0.0, %v2133
      %v2135 = vpop.f32.mrb[0].mxu0
      %v2136 = vpop.f32.mrb[0].mxu0
      %v2137 = vadd.f32 0.0, %v2136
      %v2138 = vpop.f32.mrb[0].mxu0
      %2139 = vmatprep.mubr.bf16.mxu0 0
      %2140 = vmatmul.mubr.bf16.gmra.mrb[0].mxu0 %v2078
      %v2141 = vpop.f32.mrb[0].mxu0
      %v2142 = vadd.f32 0.0, %v2141
      %v2143 = vpop.f32.mrb[0].mxu0
      %v2144 = vpop.f32.mrb[0].mxu0
      %v2145 = vadd.f32 0.0, %v2144
      %v2146 = vpop.f32.mrb[0].mxu0
      %2147 = vdwg.mxu0
      %v2148 = vadd.f32 %v2060, %v2118
      %v2149 = vadd.f32 %v2061, %v2121
      %v2150 = vadd.f32 %v2062, %v2126
      %v2151 = vadd.f32 %v2063, %v2129
      %v2152 = vadd.f32 %v2064, %v2134
      %v2153 = vadd.f32 %v2065, %v2137
      %v2154 = vadd.f32 %v2066, %v2142
      %v2155 = vadd.f32 %v2067, %v2145
      %v2156 = vrot.slane %v1345, 2
      %v2157 = vrot.slane %v1346, 2
      %v2158 = vsel %vm1567, %v2156, %v2157
      %v2160 = vpack.c.bf16 %v2158, %v1890
      %s2161 = scalar_lea.vmem %s3, 32
      %v2162 = vld [vmem:[%s2161] sm:$0xf]
      %v2164 = vsel %vm1296, %v2160, 0
      %v2167 = vsel %vm1418, %v2162, 0
      %2169 = vmatprep.subr.bf16.mxu0 0
      %2170 = vmatpush1.bf16.msra.mxu0 %v2167
      %2171 = vmatprep.subr.bf16.mxu0 0
      %2172 = vmatpush1.bf16.msra.mxu0 0
      %2173 = vmatprep.subr.bf16.mxu0 0
      %2174 = vmatpush1.bf16.msra.mxu0 0
      %2175 = vmatprep.subr.bf16.mxu0 0
      %2176 = vmatpush1.bf16.msra.mxu0 0
      %2177 = vmatprep.subr.bf16.mxu0 0
      %2178 = vmatpush1.bf16.msra.mxu0 0
      %2179 = vmatprep.subr.bf16.mxu0 0
      %2180 = vmatpush1.bf16.msra.mxu0 0
      %2181 = vmatprep.subr.bf16.mxu0 0
      %2182 = vmatpush1.bf16.msra.mxu0 0
      %2183 = vmatprep.subr.bf16.mxu0 0
      %2184 = vmatpush1.bf16.msra.mxu0 0
      %2185 = vmatprep.subr.bf16.mxu0 0
      %2186 = vmatpush1.bf16.msra.mxu0 0
      %2187 = vmatprep.subr.bf16.mxu0 0
      %2188 = vmatpush1.bf16.msra.mxu0 0
      %2189 = vmatprep.subr.bf16.mxu0 0
      %2190 = vmatpush1.bf16.msra.mxu0 0
      %2191 = vmatprep.subr.bf16.mxu0 0
      %2192 = vmatpush1.bf16.msra.mxu0 0
      %2193 = vmatprep.subr.bf16.mxu0 0
      %2194 = vmatpush1.bf16.msra.mxu0 0
      %2195 = vmatprep.subr.bf16.mxu0 0
      %2196 = vmatpush1.bf16.msra.mxu0 0
      %2197 = vmatprep.subr.bf16.mxu0 0
      %2198 = vmatpush1.bf16.msra.mxu0 0
      %2199 = vmatprep.subr.bf16.mxu0 0
      %2200 = vmatpush1.bf16.msra.mxu0 0
      %2201 = vmatprep.mubr.bf16.mxu0 0
      %2202 = vmatmul.mubr.bf16.gmra.mrb[0].mxu0 %v1610
      %v2203 = vpop.f32.mrb[0].mxu0
      %v2204 = vadd.f32 0.0, %v2203
      %v2205 = vpop.f32.mrb[0].mxu0
      %v2206 = vpop.f32.mrb[0].mxu0
      %v2207 = vadd.f32 0.0, %v2206
      %v2208 = vpop.f32.mrb[0].mxu0
      %2209 = vmatprep.mubr.bf16.mxu0 0
      %2210 = vmatmul.mubr.bf16.gmra.mrb[0].mxu0 %v1613
      %v2211 = vpop.f32.mrb[0].mxu0
      %v2212 = vadd.f32 0.0, %v2211
      %v2213 = vpop.f32.mrb[0].mxu0
      %v2214 = vpop.f32.mrb[0].mxu0
      %v2215 = vadd.f32 0.0, %v2214
      %v2216 = vpop.f32.mrb[0].mxu0
      %2217 = vmatprep.mubr.bf16.mxu0 0
      %2218 = vmatmul.mubr.bf16.gmra.mrb[0].mxu0 %v1616
      %v2219 = vpop.f32.mrb[0].mxu0
      %v2220 = vadd.f32 0.0, %v2219
      %v2221 = vpop.f32.mrb[0].mxu0
      %v2222 = vpop.f32.mrb[0].mxu0
      %v2223 = vadd.f32 0.0, %v2222
      %v2224 = vpop.f32.mrb[0].mxu0
      %2225 = vmatprep.mubr.bf16.mxu0 0
      %2226 = vmatmul.mubr.bf16.gmra.mrb[0].mxu0 %v2164
      %v2227 = vpop.f32.mrb[0].mxu0
      %v2228 = vadd.f32 0.0, %v2227
      %v2229 = vpop.f32.mrb[0].mxu0
      %v2230 = vpop.f32.mrb[0].mxu0
      %v2231 = vadd.f32 0.0, %v2230
      %v2232 = vpop.f32.mrb[0].mxu0
      %2233 = vdwg.mxu0
      %v2234 = vadd.f32 %v2148, %v2204
      %v2235 = vadd.f32 %v2149, %v2207
      %v2236 = vadd.f32 %v2150, %v2212
      %v2237 = vadd.f32 %v2151, %v2215
      %v2238 = vadd.f32 %v2152, %v2220
      %v2239 = vadd.f32 %v2153, %v2223
      %v2240 = vadd.f32 %v2154, %v2228
      %v2241 = vadd.f32 %v2155, %v2231
      %v2242 = vld [vmem:[%s4] sm:$0x1]
      %v2244 = vlaneseq
      %v2245 = vshrl.u32 %v2244, 7
      %v2246 = vsub.s32 0, %v2245
      %v2247 = vrot.slane %v2242, %v2246
      %v2249 = vadd.f32 %v2234, %v2247
      %v2250 = vadd.f32 %v2235, %v2247
      %v2251 = vadd.f32 %v2236, %v2247
      %v2252 = vadd.f32 %v2237, %v2247
      %v2253 = vadd.f32 %v2238, %v2247
      %v2254 = vadd.f32 %v2239, %v2247
      %v2255 = vadd.f32 %v2240, %v2247
      %v2256 = vadd.f32 %v2241, %v2247
      %v2257 = vld [vmem:[%s5] sm:$0x3]
      %v2258 = vld [vmem:[%s6] sm:$0x1]
      %v2260 = vlaneseq
      %v2261 = vshrl.u32 %v2260, 7
      %v2262 = vsub.s32 0, %v2261
      %v2263 = vrot.slane %v2258, %v2262
      %v2266 = vsel %vm363, %v2257, 0
      %2268 = vmatprep.subr.bf16.mxu0 0
      %2269 = vmatpush1.bf16.msra.mxu0 %v2266
      %2270 = vmatprep.subr.bf16.mxu0 0
      %2271 = vmatpush1.bf16.msra.mxu0 0
      %2272 = vmatprep.subr.bf16.mxu0 0
      %2273 = vmatpush1.bf16.msra.mxu0 0
      %2274 = vmatprep.subr.bf16.mxu0 0
      %2275 = vmatpush1.bf16.msra.mxu0 0
      %2276 = vmatprep.subr.bf16.mxu0 0
      %2277 = vmatpush1.bf16.msra.mxu0 0
      %2278 = vmatprep.subr.bf16.mxu0 0
      %2279 = vmatpush1.bf16.msra.mxu0 0
      %2280 = vmatprep.subr.bf16.mxu0 0
      %2281 = vmatpush1.bf16.msra.mxu0 0
      %2282 = vmatprep.subr.bf16.mxu0 0
      %2283 = vmatpush1.bf16.msra.mxu0 0
      %2284 = vmatprep.subr.bf16.mxu0 0
      %2285 = vmatpush1.bf16.msra.mxu0 0
      %2286 = vmatprep.subr.bf16.mxu0 0
      %2287 = vmatpush1.bf16.msra.mxu0 0
      %2288 = vmatprep.subr.bf16.mxu0 0
      %2289 = vmatpush1.bf16.msra.mxu0 0
      %2290 = vmatprep.subr.bf16.mxu0 0
      %2291 = vmatpush1.bf16.msra.mxu0 0
      %2292 = vmatprep.subr.bf16.mxu0 0
      %2293 = vmatpush1.bf16.msra.mxu0 0
      %2294 = vmatprep.subr.bf16.mxu0 0
      %2295 = vmatpush1.bf16.msra.mxu0 0
      %2296 = vmatprep.subr.bf16.mxu0 0
      %2297 = vmatpush1.bf16.msra.mxu0 0
      %2298 = vmatprep.subr.bf16.mxu0 0
      %2299 = vmatpush1.bf16.msra.mxu0 0
      %2300 = vmatprep.mubr.bf16.mxu0 0
      %2301 = vmatmul.mubr.bf16.gmra.mrb[0].mxu0 %v756
      %v2302 = vpop.f32.mrb[0].mxu0
      %v2303 = vadd.f32 %v2263, %v2302
      %v2304 = vpop.f32.mrb[0].mxu0
      %v2305 = vpop.f32.mrb[0].mxu0
      %v2306 = vadd.f32 %v2263, %v2305
      %v2307 = vpop.f32.mrb[0].mxu0
      %2308 = vmatprep.mubr.bf16.mxu0 0
      %2309 = vmatmul.mubr.bf16.gmra.mrb[0].mxu0 %v759
      %v2310 = vpop.f32.mrb[0].mxu0
      %v2311 = vadd.f32 %v2263, %v2310
      %v2312 = vpop.f32.mrb[0].mxu0
      %v2313 = vpop.f32.mrb[0].mxu0
      %v2314 = vadd.f32 %v2263, %v2313
      %v2315 = vpop.f32.mrb[0].mxu0
      %2316 = vmatprep.mubr.bf16.mxu0 0
      %2317 = vmatmul.mubr.bf16.gmra.mrb[0].mxu0 %v762
      %v2318 = vpop.f32.mrb[0].mxu0
      %v2319 = vadd.f32 %v2263, %v2318
      %v2320 = vpop.f32.mrb[0].mxu0
      %v2321 = vpop.f32.mrb[0].mxu0
      %v2322 = vadd.f32 %v2263, %v2321
      %v2323 = vpop.f32.mrb[0].mxu0
      %2324 = vmatprep.mubr.bf16.mxu0 0
      %2325 = vmatmul.mubr.bf16.gmra.mrb[0].mxu0 %v765
      %v2326 = vpop.f32.mrb[0].mxu0
      %v2327 = vadd.f32 %v2263, %v2326
      %v2328 = vpop.f32.mrb[0].mxu0
      %v2329 = vpop.f32.mrb[0].mxu0
      %v2330 = vadd.f32 %v2263, %v2329
      %v2331 = vpop.f32.mrb[0].mxu0
      %2332 = vdwg.mxu0
      %v2333 = vadd.f32 %v2249, %v2303
      %v2334 = vadd.f32 %v2250, %v2306
      %v2335 = vadd.f32 %v2251, %v2311
      %v2336 = vadd.f32 %v2252, %v2314
      %v2337 = vadd.f32 %v2253, %v2319
      %v2338 = vadd.f32 %v2254, %v2322
      %v2339 = vadd.f32 %v2255, %v2327
      %v2340 = vadd.f32 %v2256, %v2330
      %v2341 = vmax.f32 %v2333, 0.0
      %v2342 = vmax.f32 %v2334, 0.0
      %v2343 = vmax.f32 %v2335, 0.0
      %v2344 = vmax.f32 %v2336, 0.0
      %v2345 = vmax.f32 %v2337, 0.0
      %v2346 = vmax.f32 %v2338, 0.0
      %v2347 = vmax.f32 %v2339, 0.0
      %v2348 = vmax.f32 %v2340, 0.0
      %2349 = vst.msk [vmem:[%s283] sm:$0xff] %vm1296, %v2341
      %2350 = vst.msk [vmem:[%s283 + $0x8] sm:$0xff] %vm1296, %v2342
      %2351 = vst.msk [vmem:[%s283 + $0x10] sm:$0xff] %vm1296, %v2343
      %2352 = vst.msk [vmem:[%s283 + $0x18] sm:$0xff] %vm1296, %v2344
      %2353 = vst.msk [vmem:[%s283 + $0x20] sm:$0xff] %vm1296, %v2345
      %2354 = vst.msk [vmem:[%s283 + $0x28] sm:$0xff] %vm1296, %v2346
      %2355 = vst.msk [vmem:[%s283 + $0x30] sm:$0xff] %vm1296, %v2347
      %2356 = vst.msk [vmem:[%s283 + $0x38] sm:$0xff] %vm1296, %v2348
      %p2357 = scmp.lt.s32.totalorder %s18, 1
      %s2358 = scalar_select %p2357, %s18, 1
      %s2359 = smul.addr %s2358, 8
      %s2360 = smul.addr %s2359, 8
      %s2361 = scalar_lea.vmem %s7, %s2360
      // Predicated region
      $region49: #{basic_block_forward.1} parent=47 // pred_check
        %p2362 = pneg %p188
      $region50: #{basic_block_forward.1} parent=47 // pred_check_branch
        %2364 = sbr.rel (%p2362) target = $region52
      $region51: #{basic_block_forward.1} parent=47 // pred_region
        _
      $region52: #{basic_block_forward.1} parent=47 // pred_fallthru
        _
    $region48: #{basic_block_forward.1} parent=5 // pred_fallthru
      _
    %p2365 = scmp.le.s32.totalorder 2, %s13
    // Predicated region
    $region53: #{basic_block_forward.1} parent=5 // pred_check
      %p2366 = pneg %p2365
    $region54: #{basic_block_forward.1} parent=5 // pred_check_branch
      %2368 = sbr.rel (%p2366) target = $region56
    $region55: #{basic_block_forward.1} parent=5 // pred_region
      %s2369 = ssub.s32 %s13, 2
      // Predicated region
      $region57: #{basic_block_forward.1} parent=55 // pred_check
        %p2370 = pneg %p194
      $region58: #{basic_block_forward.1} parent=55 // pred_check_branch
        %2372 = sbr.rel (%p2370) target = $region60
      $region59: #{basic_block_forward.1} parent=55 // pred_region
        %p2373 = scmp.lt.s32.totalorder %s19, 1
        %s2374 = scalar_select %p2373, %s19, 1
        %s2375 = smul.addr %s2374, 8
        %s2376 = smul.addr %s2375, 8
        %s2377 = scalar_lea.vmem %s7, %s2376
      $region60: #{basic_block_forward.1} parent=55 // pred_fallthru
        _
    $region56: #{basic_block_forward.1} parent=5 // pred_fallthru
      _
  $region6: #{basic_block_forward.1} parent=0 // loop_footer
    %s17 = sadd.s32 1, %s13
  $region7: #{basic_block_forward.1} parent=0 // loop_footer_branch
    %12 = sbr.rel target = $region3
  $region8: #{basic_block_forward.1} parent=0 // loop_exit
    _

</llo_original>
